<compile_context>
chip_gen: v5e
topology: v5e:2x2
jax: 0.10.0
libtpu: 0.0.40
codegen_flags: <defaults>
</compile_context>

<pallas_src>
import numpy as np

import jax
import jax.numpy as jnp
from jax.experimental import pallas as pl
from jax.experimental.pallas import tpu as pltpu


def _gaussian_taps_1d(kernel_size: int, sigma: float) -> np.ndarray:
    """Normalized 1-D Gaussian taps.

    The PyTorch module builds the (1, k, k) kernel as a product of per-axis
    Gaussians and normalizes the whole product; the T-axis factor (size 1)
    cancels in the normalization, so the 2-D kernel is exactly outer(w, w)
    with the w computed here.
    """
    ax = np.arange(kernel_size, dtype=np.float64)
    mean = (kernel_size - 1) / 2.0
    g = np.exp(-(((ax - mean) / float(sigma)) ** 2) / 2.0)
    return (g / g.sum()).astype(np.float32)


def _ceil_to(x: int, m: int) -> int:
    return ((x + m - 1) // m) * m


def _largest_divisor_leq(n: int, cap: int) -> int:
    cap = max(1, min(cap, n))
    for d in range(cap, 0, -1):
        if n % d == 0:
            return d
    return 1


def _make_blur_kernel(taps, tb, h, w, h_out, w_out, pad):
    k = len(taps)
    taps = [float(v) for v in taps]

    def kernel(x_ref, o_ref, xp_ref):
        # Zero the halo borders of the scratch every step (cheap thin strips;
        # correct regardless of how the grid is sharded across cores).
        if pad > 0:
            zrow = jnp.zeros((tb, pad, w + 2 * pad), jnp.float32)
            zcol = jnp.zeros((tb, h, pad), jnp.float32)
            xp_ref[:, 0:pad, :] = zrow
            xp_ref[:, pad + h:2 * pad + h, :] = zrow
            xp_ref[:, pad:pad + h, 0:pad] = zcol
            xp_ref[:, pad:pad + h, pad + w:2 * pad + w] = zcol

        # Un-padded tile goes into the interior of the halo'd scratch.
        xp_ref[:, pad:pad + h, pad:pad + w] = x_ref[...].astype(jnp.float32)

        # Vertical (H) pass: 1-D taps as static sublane slices of the scratch.
        acc = taps[0] * xp_ref[:, 0:h_out, :]
        for dy in range(1, k):
            acc = acc + taps[dy] * xp_ref[:, dy:dy + h_out, :]

        # Horizontal (W) pass: static lane slices of the VMEM-resident
        # intermediate (never written back to HBM in between).
        out = taps[0] * acc[:, :, 0:w_out]
        for dx in range(1, k):
            out = out + taps[dx] * acc[:, :, dx:dx + w_out]

        o_ref[...] = out.astype(o_ref.dtype)

    return kernel


def gaussian_smoothing(x, kernel_size: int, sigma: float):
    """Depthwise (1, k, k) Gaussian blur of an NCTHW tensor via Pallas."""
    n, c, t, h, w = x.shape
    k = int(kernel_size)
    pad = (k - 1) // 2
    h_out = h + 2 * pad - (k - 1)   # == h for odd k; reproduces the even-k shrink
    w_out = w + 2 * pad - (k - 1)

    taps = _gaussian_taps_1d(k, sigma)

    b = n * c * t
    xb = x.reshape(b, h, w)

    # Per-frame VMEM footprint using the *padded* native (8, 128) layout so
    # small frames (lane-padded to 128) don't blow the budget.
    io_itemsize = int(np.dtype(x.dtype).itemsize)
    in_tile = _ceil_to(h, 8) * _ceil_to(w, 128) * io_itemsize
    out_tile = _ceil_to(h_out, 8) * _ceil_to(w_out, 128) * io_itemsize
    scratch_tile = _ceil_to(h + 2 * pad, 8) * _ceil_to(w + 2 * pad, 128) * 4
    per_frame = 2 * in_tile + 2 * out_tile + scratch_tile  # double-buffered I/O + scratch

    # Pack as many whole frames per grid step as fit in ~40 MiB of VMEM
    # (amortizes the ~0.35 us per-step overhead; stays under v7x's 64 MiB).
    vmem_budget = 40 * 2 ** 20
    tb_cap = max(1, vmem_budget // per_frame)
    tb = _largest_divisor_leq(b, tb_cap)
    grid = (b // tb,)

    kernel = _make_blur_kernel(taps, tb, h, w, h_out, w_out, pad)

    vmem_limit = int(min(60 * 2 ** 20,
                         max(32 * 2 ** 20, tb * per_frame + (4 << 20))))

    yb = pl.pallas_call(
        kernel,
        out_shape=jax.ShapeDtypeStruct((b, h_out, w_out), x.dtype),
        grid_spec=pltpu.PrefetchScalarGridSpec(
            num_scalar_prefetch=0,
            grid=grid,
            in_specs=[pl.BlockSpec((tb, h, w), lambda i: (i, 0, 0))],
            out_specs=pl.BlockSpec((tb, h_out, w_out), lambda i: (i, 0, 0)),
            scratch_shapes=[pltpu.VMEM((tb, h + 2 * pad, w + 2 * pad), jnp.float32)],
        ),
        compiler_params=pltpu.CompilerParams(
            dimension_semantics=("parallel",),
            vmem_limit_bytes=vmem_limit,
        ),
    )(xb)

    return yb.reshape(n, c, t, h_out, w_out)


class GaussianSmoothing:
    """Functional JAX/Pallas counterpart of the PyTorch GaussianSmoothing module."""

    def __init__(self, channels, kernel_size, sigma, dim=3):
        if dim != 3:
            raise NotImplementedError("only dim=3 (Conv3d with (1,k,k) kernel) is supported")
        if isinstance(kernel_size, (list, tuple)):
            kernel_size = kernel_size[-1]
        if isinstance(sigma, (list, tuple)):
            sigma = sigma[-1]
        self.channels = channels
        self.kernel_size = int(kernel_size)
        self.sigma = float(sigma)

    def __call__(self, x):
        return gaussian_smoothing(x, self.kernel_size, self.sigma)


def _reference(x, kernel_size, sigma):
    """Pure-JAX reference: depthwise 2-D conv with the full (k, k) Gaussian."""
    n, c, t, h, w = x.shape
    k = int(kernel_size)
    pad = (k - 1) // 2
    w1 = _gaussian_taps_1d(k, sigma)
    kern = jnp.asarray(np.outer(w1, w1), dtype=jnp.float32)[None, None, :, :]
    xb = x.reshape(n * c * t, 1, h, w).astype(jnp.float32)
    y = jax.lax.conv_general_dilated(
        xb, kern, window_strides=(1, 1),
        padding=((pad, pad), (pad, pad)),
        dimension_numbers=("NCHW", "OIHW", "NCHW"),
        precision=jax.lax.Precision.HIGHEST)
    return y.reshape(n, c, t, y.shape[-2], y.shape[-1]).astype(x.dtype)


if __name__ == "__main__":
    key = jax.random.PRNGKey(0)
    n, c, t, h, w = 2, 3, 4, 16, 16          # NCTHW, C=3 as in the module
    x = jax.random.normal(key, (n, c, t, h, w), dtype=jnp.float32)

    smoother = GaussianSmoothing(channels=c, kernel_size=5, sigma=1.0)
    y = jax.block_until_ready(smoother(x))

    y_ref = jax.block_until_ready(_reference(x, 5, 1.0))
    np.testing.assert_allclose(np.asarray(y), np.asarray(y_ref), rtol=1e-4, atol=1e-5)

    print("KERNEL_OK")
</pallas_src>

<mosaic_0001>
module attributes {stable_mosaic.version = 11 : i64} {
  func.func @kernel(%arg0: i32, %arg1: memref<24x16x16xf32, #tpu.memory_space<vmem>>, %arg2: memref<24x16x16xf32, #tpu.memory_space<vmem>>, %arg3: memref<24x20x20xf32, #tpu.memory_space<vmem>>) attributes {dimension_semantics = [#tpu.dimension_semantics<parallel>], iteration_bounds = array<i64: 1>, scalar_prefetch = 0 : i64, scratch_operands = 1 : i64, tpu.core_type = #tpu.core_type<tc>, window_params = [{transform_indices = @transform_0, window_bounds = array<i64: 24, 16, 16>}, {transform_indices = @transform_1, window_bounds = array<i64: 24, 16, 16>}]} {
    %cst = arith.constant 0.000000e+00 : f32
    %0 = vector.broadcast %cst : f32 to vector<24x2x20xf32>
    %cst_0 = arith.constant 0.000000e+00 : f32
    %1 = vector.broadcast %cst_0 : f32 to vector<24x16x2xf32>
    %c0 = arith.constant 0 : index
    %c0_1 = arith.constant 0 : index
    %c0_2 = arith.constant 0 : index
    %2 = vector.load %arg3[%c0, %c0_1, %c0_2] : memref<24x20x20xf32, #tpu.memory_space<vmem>>, vector<24x2x20xf32>
    tpu.vector_store %arg3[%c0, %c0_1, %c0_2], %0 {strides = array<i32>} : memref<24x20x20xf32, #tpu.memory_space<vmem>>, vector<24x2x20xf32>,
    %c0_3 = arith.constant 0 : index
    %c18 = arith.constant 18 : index
    %c0_4 = arith.constant 0 : index
    %3 = vector.load %arg3[%c0_3, %c18, %c0_4] : memref<24x20x20xf32, #tpu.memory_space<vmem>>, vector<24x2x20xf32>
    tpu.vector_store %arg3[%c0_3, %c18, %c0_4], %0 {strides = array<i32>} : memref<24x20x20xf32, #tpu.memory_space<vmem>>, vector<24x2x20xf32>,
    %c0_5 = arith.constant 0 : index
    %c2 = arith.constant 2 : index
    %c0_6 = arith.constant 0 : index
    %4 = vector.load %arg3[%c0_5, %c2, %c0_6] : memref<24x20x20xf32, #tpu.memory_space<vmem>>, vector<24x16x2xf32>
    tpu.vector_store %arg3[%c0_5, %c2, %c0_6], %1 {strides = array<i32>} : memref<24x20x20xf32, #tpu.memory_space<vmem>>, vector<24x16x2xf32>,
    %c0_7 = arith.constant 0 : index
    %c2_8 = arith.constant 2 : index
    %c18_9 = arith.constant 18 : index
    %5 = vector.load %arg3[%c0_7, %c2_8, %c18_9] : memref<24x20x20xf32, #tpu.memory_space<vmem>>, vector<24x16x2xf32>
    tpu.vector_store %arg3[%c0_7, %c2_8, %c18_9], %1 {strides = array<i32>} : memref<24x20x20xf32, #tpu.memory_space<vmem>>, vector<24x16x2xf32>,
    %c0_10 = arith.constant 0 : index
    %c0_11 = arith.constant 0 : index
    %c0_12 = arith.constant 0 : index
    %6 = vector.load %arg1[%c0_10, %c0_11, %c0_12] : memref<24x16x16xf32, #tpu.memory_space<vmem>>, vector<24x16x16xf32>
    %c0_13 = arith.constant 0 : index
    %c2_14 = arith.constant 2 : index
    %c2_15 = arith.constant 2 : index
    %7 = vector.load %arg3[%c0_13, %c2_14, %c2_15] : memref<24x20x20xf32, #tpu.memory_space<vmem>>, vector<24x16x16xf32>
    tpu.vector_store %arg3[%c0_13, %c2_14, %c2_15], %6 {strides = array<i32>} : memref<24x20x20xf32, #tpu.memory_space<vmem>>, vector<24x16x16xf32>,
    %c0_16 = arith.constant 0 : index
    %c0_17 = arith.constant 0 : index
    %c0_18 = arith.constant 0 : index
    %8 = vector.load %arg3[%c0_16, %c0_17, %c0_18] : memref<24x20x20xf32, #tpu.memory_space<vmem>>, vector<24x16x20xf32>
    %cst_19 = arith.constant 0.054488685 : f32
    %9 = vector.broadcast %cst_19 : f32 to vector<24x16x20xf32>
    %10 = arith.mulf %9, %8 : vector<24x16x20xf32>
    %c0_20 = arith.constant 0 : index
    %c1 = arith.constant 1 : index
    %c0_21 = arith.constant 0 : index
    %11 = vector.load %arg3[%c0_20, %c1, %c0_21] : memref<24x20x20xf32, #tpu.memory_space<vmem>>, vector<24x16x20xf32>
    %cst_22 = arith.constant 0.244201347 : f32
    %12 = vector.broadcast %cst_22 : f32 to vector<24x16x20xf32>
    %13 = arith.mulf %12, %11 : vector<24x16x20xf32>
    %14 = arith.addf %10, %13 : vector<24x16x20xf32>
    %c0_23 = arith.constant 0 : index
    %c2_24 = arith.constant 2 : index
    %c0_25 = arith.constant 0 : index
    %15 = vector.load %arg3[%c0_23, %c2_24, %c0_25] : memref<24x20x20xf32, #tpu.memory_space<vmem>>, vector<24x16x20xf32>
    %cst_26 = arith.constant 0.402619958 : f32
    %16 = vector.broadcast %cst_26 : f32 to vector<24x16x20xf32>
    %17 = arith.mulf %16, %15 : vector<24x16x20xf32>
    %18 = arith.addf %14, %17 : vector<24x16x20xf32>
    %c0_27 = arith.constant 0 : index
    %c3 = arith.constant 3 : index
    %c0_28 = arith.constant 0 : index
    %19 = vector.load %arg3[%c0_27, %c3, %c0_28] : memref<24x20x20xf32, #tpu.memory_space<vmem>>, vector<24x16x20xf32>
    %cst_29 = arith.constant 0.244201347 : f32
    %20 = vector.broadcast %cst_29 : f32 to vector<24x16x20xf32>
    %21 = arith.mulf %20, %19 : vector<24x16x20xf32>
    %22 = arith.addf %18, %21 : vector<24x16x20xf32>
    %c0_30 = arith.constant 0 : index
    %c4 = arith.constant 4 : index
    %c0_31 = arith.constant 0 : index
    %23 = vector.load %arg3[%c0_30, %c4, %c0_31] : memref<24x20x20xf32, #tpu.memory_space<vmem>>, vector<24x16x20xf32>
    %cst_32 = arith.constant 0.054488685 : f32
    %24 = vector.broadcast %cst_32 : f32 to vector<24x16x20xf32>
    %25 = arith.mulf %24, %23 : vector<24x16x20xf32>
    %26 = arith.addf %22, %25 : vector<24x16x20xf32>
    %27 = vector.extract_strided_slice %26 {offsets = [0, 0, 0], sizes = [24, 16, 16], strides = [1, 1, 1]} : vector<24x16x20xf32> to vector<24x16x16xf32>
    %cst_33 = arith.constant 0.054488685 : f32
    %28 = vector.broadcast %cst_33 : f32 to vector<24x16x16xf32>
    %29 = arith.mulf %28, %27 : vector<24x16x16xf32>
    %30 = vector.extract_strided_slice %26 {offsets = [0, 0, 1], sizes = [24, 16, 16], strides = [1, 1, 1]} : vector<24x16x20xf32> to vector<24x16x16xf32>
    %cst_34 = arith.constant 0.244201347 : f32
    %31 = vector.broadcast %cst_34 : f32 to vector<24x16x16xf32>
    %32 = arith.mulf %31, %30 : vector<24x16x16xf32>
    %33 = arith.addf %29, %32 : vector<24x16x16xf32>
    %34 = vector.extract_strided_slice %26 {offsets = [0, 0, 2], sizes = [24, 16, 16], strides = [1, 1, 1]} : vector<24x16x20xf32> to vector<24x16x16xf32>
    %cst_35 = arith.constant 0.402619958 : f32
    %35 = vector.broadcast %cst_35 : f32 to vector<24x16x16xf32>
    %36 = arith.mulf %35, %34 : vector<24x16x16xf32>
    %37 = arith.addf %33, %36 : vector<24x16x16xf32>
    %38 = vector.extract_strided_slice %26 {offsets = [0, 0, 3], sizes = [24, 16, 16], strides = [1, 1, 1]} : vector<24x16x20xf32> to vector<24x16x16xf32>
    %cst_36 = arith.constant 0.244201347 : f32
    %39 = vector.broadcast %cst_36 : f32 to vector<24x16x16xf32>
    %40 = arith.mulf %39, %38 : vector<24x16x16xf32>
    %41 = arith.addf %37, %40 : vector<24x16x16xf32>
    %42 = vector.extract_strided_slice %26 {offsets = [0, 0, 4], sizes = [24, 16, 16], strides = [1, 1, 1]} : vector<24x16x20xf32> to vector<24x16x16xf32>
    %cst_37 = arith.constant 0.054488685 : f32
    %43 = vector.broadcast %cst_37 : f32 to vector<24x16x16xf32>
    %44 = arith.mulf %43, %42 : vector<24x16x16xf32>
    %45 = arith.addf %41, %44 : vector<24x16x16xf32>
    %c0_38 = arith.constant 0 : index
    %c0_39 = arith.constant 0 : index
    %c0_40 = arith.constant 0 : index
    %46 = vector.load %arg2[%c0_38, %c0_39, %c0_40] : memref<24x16x16xf32, #tpu.memory_space<vmem>>, vector<24x16x16xf32>
    tpu.vector_store %arg2[%c0_38, %c0_39, %c0_40], %45 {strides = array<i32>} : memref<24x16x16xf32, #tpu.memory_space<vmem>>, vector<24x16x16xf32>,
    return
  }
  func.func @transform_0(%arg0: i32) -> (i32, i32, i32) {
    %c0_i32 = arith.constant 0 : i32
    %c0_i32_0 = arith.constant 0 : i32
    %c0_i32_1 = arith.constant 0 : i32
    return %arg0, %c0_i32, %c0_i32_0 : i32, i32, i32
  }
  func.func @transform_1(%arg0: i32) -> (i32, i32, i32) {
    %c0_i32 = arith.constant 0 : i32
    %c0_i32_0 = arith.constant 0 : i32
    %c0_i32_1 = arith.constant 0 : i32
    return %arg0, %c0_i32, %c0_i32_0 : i32, i32, i32
  }
}

</mosaic_0001>

<llo_original>
// kernel: tpu_custom_call.1
$region0: #{tpu_custom_call.1}
  #allocation0 [shape = 'u32[]', space=smem, size = 0x4, offset = 0x4, fixed_abs, tag = 'smem constant byte address 0x4 - core index']
  #allocation1 [shape = 'u32[72,128]{1,0:T(1,128)}', space=vmem, size = 0x9000, scoped, tag = 'internal scratch']
  #allocation2 [shape = 'f32[24,20,20]{2,1,0:T(8,128)}', space=vmem, size = 0x48000, scoped, tag = 'scratch operand']
  %s0 = inlined_call_operand.vmem [shape: f32[24,16,16], index: 0, kind: input, shape index: {}]
  %s1 = inlined_call_operand.vmem [shape: f32[24,16,16], index: 1, kind: output, shape index: {}]
  %s2 = sld [smem:[#allocation0]]
  $region14: #{tpu_custom_call.1} parent=0
    _
  %s4 = ssub.s32 1, %s2
  %s5 = scalar_select 0, %s4, %s2
  // Predicated region
  $region2: #{tpu_custom_call.1} parent=0 // pred_check
    _
  $region3: #{tpu_custom_call.1} parent=0 // pred_check_branch
    %7 = sbr.rel (0) target = $region5
  $region4: #{tpu_custom_call.1} parent=0 // pred_region
    _
  $region5: #{tpu_custom_call.1} parent=0 // pred_fallthru
    _
  %vm8 = vcmask 156672
  %9 = vst.msk [vmem:[#allocation2] sm:$0x3] %vm8, 0.0
  %10 = vst.msk [vmem:[#allocation2 + $0x18] sm:$0x3] %vm8, 0.0
  %11 = vst.msk [vmem:[#allocation2 + $0x30] sm:$0x3] %vm8, 0.0
  %12 = vst.msk [vmem:[#allocation2 + $0x48] sm:$0x3] %vm8, 0.0
  %13 = vst.msk [vmem:[#allocation2 + $0x60] sm:$0x3] %vm8, 0.0
  %14 = vst.msk [vmem:[#allocation2 + $0x78] sm:$0x3] %vm8, 0.0
  %15 = vst.msk [vmem:[#allocation2 + $0x90] sm:$0x3] %vm8, 0.0
  %16 = vst.msk [vmem:[#allocation2 + $0xa8] sm:$0x3] %vm8, 0.0
  %17 = vst.msk [vmem:[#allocation2 + $0xc0] sm:$0x3] %vm8, 0.0
  %18 = vst.msk [vmem:[#allocation2 + $0xd8] sm:$0x3] %vm8, 0.0
  %19 = vst.msk [vmem:[#allocation2 + $0xf0] sm:$0x3] %vm8, 0.0
  %20 = vst.msk [vmem:[#allocation2 + $0x108] sm:$0x3] %vm8, 0.0
  %21 = vst.msk [vmem:[#allocation2 + $0x120] sm:$0x3] %vm8, 0.0
  %22 = vst.msk [vmem:[#allocation2 + $0x138] sm:$0x3] %vm8, 0.0
  %23 = vst.msk [vmem:[#allocation2 + $0x150] sm:$0x3] %vm8, 0.0
  %24 = vst.msk [vmem:[#allocation2 + $0x168] sm:$0x3] %vm8, 0.0
  %25 = vst.msk [vmem:[#allocation2 + $0x180] sm:$0x3] %vm8, 0.0
  %26 = vst.msk [vmem:[#allocation2 + $0x198] sm:$0x3] %vm8, 0.0
  %27 = vst.msk [vmem:[#allocation2 + $0x1b0] sm:$0x3] %vm8, 0.0
  %28 = vst.msk [vmem:[#allocation2 + $0x1c8] sm:$0x3] %vm8, 0.0
  %29 = vst.msk [vmem:[#allocation2 + $0x1e0] sm:$0x3] %vm8, 0.0
  %30 = vst.msk [vmem:[#allocation2 + $0x1f8] sm:$0x3] %vm8, 0.0
  %31 = vst.msk [vmem:[#allocation2 + $0x210] sm:$0x3] %vm8, 0.0
  %32 = vst.msk [vmem:[#allocation2 + $0x228] sm:$0x3] %vm8, 0.0
  %33 = vst.msk [vmem:[#allocation2 + $0x12] sm:$0x3] %vm8, 0.0
  %34 = vst.msk [vmem:[#allocation2 + $0x2a] sm:$0x3] %vm8, 0.0
  %35 = vst.msk [vmem:[#allocation2 + $0x42] sm:$0x3] %vm8, 0.0
  %36 = vst.msk [vmem:[#allocation2 + $0x5a] sm:$0x3] %vm8, 0.0
  %37 = vst.msk [vmem:[#allocation2 + $0x72] sm:$0x3] %vm8, 0.0
  %38 = vst.msk [vmem:[#allocation2 + $0x8a] sm:$0x3] %vm8, 0.0
  %39 = vst.msk [vmem:[#allocation2 + $0xa2] sm:$0x3] %vm8, 0.0
  %40 = vst.msk [vmem:[#allocation2 + $0xba] sm:$0x3] %vm8, 0.0
  %41 = vst.msk [vmem:[#allocation2 + $0xd2] sm:$0x3] %vm8, 0.0
  %42 = vst.msk [vmem:[#allocation2 + $0xea] sm:$0x3] %vm8, 0.0
  %43 = vst.msk [vmem:[#allocation2 + $0x102] sm:$0x3] %vm8, 0.0
  %44 = vst.msk [vmem:[#allocation2 + $0x11a] sm:$0x3] %vm8, 0.0
  %45 = vst.msk [vmem:[#allocation2 + $0x132] sm:$0x3] %vm8, 0.0
  %46 = vst.msk [vmem:[#allocation2 + $0x14a] sm:$0x3] %vm8, 0.0
  %47 = vst.msk [vmem:[#allocation2 + $0x162] sm:$0x3] %vm8, 0.0
  %48 = vst.msk [vmem:[#allocation2 + $0x17a] sm:$0x3] %vm8, 0.0
  %49 = vst.msk [vmem:[#allocation2 + $0x192] sm:$0x3] %vm8, 0.0
  %50 = vst.msk [vmem:[#allocation2 + $0x1aa] sm:$0x3] %vm8, 0.0
  %51 = vst.msk [vmem:[#allocation2 + $0x1c2] sm:$0x3] %vm8, 0.0
  %52 = vst.msk [vmem:[#allocation2 + $0x1da] sm:$0x3] %vm8, 0.0
  %53 = vst.msk [vmem:[#allocation2 + $0x1f2] sm:$0x3] %vm8, 0.0
  %54 = vst.msk [vmem:[#allocation2 + $0x20a] sm:$0x3] %vm8, 0.0
  %55 = vst.msk [vmem:[#allocation2 + $0x222] sm:$0x3] %vm8, 0.0
  %56 = vst.msk [vmem:[#allocation2 + $0x23a] sm:$0x3] %vm8, 0.0
  %vm57 = vcmask 15360
  %58 = vst.msk [vmem:[#allocation2 + $0x2] sm:$0xff] %vm57, 0.0
  %59 = vst.msk [vmem:[#allocation2 + $0xa] sm:$0xff] %vm57, 0.0
  %60 = vst.msk [vmem:[#allocation2 + $0x1a] sm:$0xff] %vm57, 0.0
  %61 = vst.msk [vmem:[#allocation2 + $0x22] sm:$0xff] %vm57, 0.0
  %62 = vst.msk [vmem:[#allocation2 + $0x32] sm:$0xff] %vm57, 0.0
  %63 = vst.msk [vmem:[#allocation2 + $0x3a] sm:$0xff] %vm57, 0.0
  %64 = vst.msk [vmem:[#allocation2 + $0x4a] sm:$0xff] %vm57, 0.0
  %65 = vst.msk [vmem:[#allocation2 + $0x52] sm:$0xff] %vm57, 0.0
  %66 = vst.msk [vmem:[#allocation2 + $0x62] sm:$0xff] %vm57, 0.0
  %67 = vst.msk [vmem:[#allocation2 + $0x6a] sm:$0xff] %vm57, 0.0
  %68 = vst.msk [vmem:[#allocation2 + $0x7a] sm:$0xff] %vm57, 0.0
  %69 = vst.msk [vmem:[#allocation2 + $0x82] sm:$0xff] %vm57, 0.0
  %70 = vst.msk [vmem:[#allocation2 + $0x92] sm:$0xff] %vm57, 0.0
  %71 = vst.msk [vmem:[#allocation2 + $0x9a] sm:$0xff] %vm57, 0.0
  %72 = vst.msk [vmem:[#allocation2 + $0xaa] sm:$0xff] %vm57, 0.0
  %73 = vst.msk [vmem:[#allocation2 + $0xb2] sm:$0xff] %vm57, 0.0
  %74 = vst.msk [vmem:[#allocation2 + $0xc2] sm:$0xff] %vm57, 0.0
  %75 = vst.msk [vmem:[#allocation2 + $0xca] sm:$0xff] %vm57, 0.0
  %76 = vst.msk [vmem:[#allocation2 + $0xda] sm:$0xff] %vm57, 0.0
  %77 = vst.msk [vmem:[#allocation2 + $0xe2] sm:$0xff] %vm57, 0.0
  %78 = vst.msk [vmem:[#allocation2 + $0xf2] sm:$0xff] %vm57, 0.0
  %79 = vst.msk [vmem:[#allocation2 + $0xfa] sm:$0xff] %vm57, 0.0
  %80 = vst.msk [vmem:[#allocation2 + $0x10a] sm:$0xff] %vm57, 0.0
  %81 = vst.msk [vmem:[#allocation2 + $0x112] sm:$0xff] %vm57, 0.0
  %82 = vst.msk [vmem:[#allocation2 + $0x122] sm:$0xff] %vm57, 0.0
  %83 = vst.msk [vmem:[#allocation2 + $0x12a] sm:$0xff] %vm57, 0.0
  %84 = vst.msk [vmem:[#allocation2 + $0x13a] sm:$0xff] %vm57, 0.0
  %85 = vst.msk [vmem:[#allocation2 + $0x142] sm:$0xff] %vm57, 0.0
  %86 = vst.msk [vmem:[#allocation2 + $0x152] sm:$0xff] %vm57, 0.0
  %87 = vst.msk [vmem:[#allocation2 + $0x15a] sm:$0xff] %vm57, 0.0
  %88 = vst.msk [vmem:[#allocation2 + $0x16a] sm:$0xff] %vm57, 0.0
  %89 = vst.msk [vmem:[#allocation2 + $0x172] sm:$0xff] %vm57, 0.0
  %90 = vst.msk [vmem:[#allocation2 + $0x182] sm:$0xff] %vm57, 0.0
  %91 = vst.msk [vmem:[#allocation2 + $0x18a] sm:$0xff] %vm57, 0.0
  %92 = vst.msk [vmem:[#allocation2 + $0x19a] sm:$0xff] %vm57, 0.0
  %93 = vst.msk [vmem:[#allocation2 + $0x1a2] sm:$0xff] %vm57, 0.0
  %94 = vst.msk [vmem:[#allocation2 + $0x1b2] sm:$0xff] %vm57, 0.0
  %95 = vst.msk [vmem:[#allocation2 + $0x1ba] sm:$0xff] %vm57, 0.0
  %96 = vst.msk [vmem:[#allocation2 + $0x1ca] sm:$0xff] %vm57, 0.0
  %97 = vst.msk [vmem:[#allocation2 + $0x1d2] sm:$0xff] %vm57, 0.0
  %98 = vst.msk [vmem:[#allocation2 + $0x1e2] sm:$0xff] %vm57, 0.0
  %99 = vst.msk [vmem:[#allocation2 + $0x1ea] sm:$0xff] %vm57, 0.0
  %100 = vst.msk [vmem:[#allocation2 + $0x1fa] sm:$0xff] %vm57, 0.0
  %101 = vst.msk [vmem:[#allocation2 + $0x202] sm:$0xff] %vm57, 0.0
  %102 = vst.msk [vmem:[#allocation2 + $0x212] sm:$0xff] %vm57, 0.0
  %103 = vst.msk [vmem:[#allocation2 + $0x21a] sm:$0xff] %vm57, 0.0
  %104 = vst.msk [vmem:[#allocation2 + $0x22a] sm:$0xff] %vm57, 0.0
  %105 = vst.msk [vmem:[#allocation2 + $0x232] sm:$0xff] %vm57, 0.0
  %vm106 = vcmask 162960
  %107 = vst.msk [vmem:[#allocation2 + $0x2] sm:$0xff] %vm106, 0.0
  %108 = vst.msk [vmem:[#allocation2 + $0xa] sm:$0xff] %vm106, 0.0
  %109 = vst.msk [vmem:[#allocation2 + $0x1a] sm:$0xff] %vm106, 0.0
  %110 = vst.msk [vmem:[#allocation2 + $0x22] sm:$0xff] %vm106, 0.0
  %111 = vst.msk [vmem:[#allocation2 + $0x32] sm:$0xff] %vm106, 0.0
  %112 = vst.msk [vmem:[#allocation2 + $0x3a] sm:$0xff] %vm106, 0.0
  %113 = vst.msk [vmem:[#allocation2 + $0x4a] sm:$0xff] %vm106, 0.0
  %114 = vst.msk [vmem:[#allocation2 + $0x52] sm:$0xff] %vm106, 0.0
  %115 = vst.msk [vmem:[#allocation2 + $0x62] sm:$0xff] %vm106, 0.0
  %116 = vst.msk [vmem:[#allocation2 + $0x6a] sm:$0xff] %vm106, 0.0
  %117 = vst.msk [vmem:[#allocation2 + $0x7a] sm:$0xff] %vm106, 0.0
  %118 = vst.msk [vmem:[#allocation2 + $0x82] sm:$0xff] %vm106, 0.0
  %119 = vst.msk [vmem:[#allocation2 + $0x92] sm:$0xff] %vm106, 0.0
  %120 = vst.msk [vmem:[#allocation2 + $0x9a] sm:$0xff] %vm106, 0.0
  %121 = vst.msk [vmem:[#allocation2 + $0xaa] sm:$0xff] %vm106, 0.0
  %122 = vst.msk [vmem:[#allocation2 + $0xb2] sm:$0xff] %vm106, 0.0
  %123 = vst.msk [vmem:[#allocation2 + $0xc2] sm:$0xff] %vm106, 0.0
  %124 = vst.msk [vmem:[#allocation2 + $0xca] sm:$0xff] %vm106, 0.0
  %125 = vst.msk [vmem:[#allocation2 + $0xda] sm:$0xff] %vm106, 0.0
  %126 = vst.msk [vmem:[#allocation2 + $0xe2] sm:$0xff] %vm106, 0.0
  %127 = vst.msk [vmem:[#allocation2 + $0xf2] sm:$0xff] %vm106, 0.0
  %128 = vst.msk [vmem:[#allocation2 + $0xfa] sm:$0xff] %vm106, 0.0
  %129 = vst.msk [vmem:[#allocation2 + $0x10a] sm:$0xff] %vm106, 0.0
  %130 = vst.msk [vmem:[#allocation2 + $0x112] sm:$0xff] %vm106, 0.0
  %131 = vst.msk [vmem:[#allocation2 + $0x122] sm:$0xff] %vm106, 0.0
  %132 = vst.msk [vmem:[#allocation2 + $0x12a] sm:$0xff] %vm106, 0.0
  %133 = vst.msk [vmem:[#allocation2 + $0x13a] sm:$0xff] %vm106, 0.0
  %134 = vst.msk [vmem:[#allocation2 + $0x142] sm:$0xff] %vm106, 0.0
  %135 = vst.msk [vmem:[#allocation2 + $0x152] sm:$0xff] %vm106, 0.0
  %136 = vst.msk [vmem:[#allocation2 + $0x15a] sm:$0xff] %vm106, 0.0
  %137 = vst.msk [vmem:[#allocation2 + $0x16a] sm:$0xff] %vm106, 0.0
  %138 = vst.msk [vmem:[#allocation2 + $0x172] sm:$0xff] %vm106, 0.0
  %139 = vst.msk [vmem:[#allocation2 + $0x182] sm:$0xff] %vm106, 0.0
  %140 = vst.msk [vmem:[#allocation2 + $0x18a] sm:$0xff] %vm106, 0.0
  %141 = vst.msk [vmem:[#allocation2 + $0x19a] sm:$0xff] %vm106, 0.0
  %142 = vst.msk [vmem:[#allocation2 + $0x1a2] sm:$0xff] %vm106, 0.0
  %143 = vst.msk [vmem:[#allocation2 + $0x1b2] sm:$0xff] %vm106, 0.0
  %144 = vst.msk [vmem:[#allocation2 + $0x1ba] sm:$0xff] %vm106, 0.0
  %145 = vst.msk [vmem:[#allocation2 + $0x1ca] sm:$0xff] %vm106, 0.0
  %146 = vst.msk [vmem:[#allocation2 + $0x1d2] sm:$0xff] %vm106, 0.0
  %147 = vst.msk [vmem:[#allocation2 + $0x1e2] sm:$0xff] %vm106, 0.0
  %148 = vst.msk [vmem:[#allocation2 + $0x1ea] sm:$0xff] %vm106, 0.0
  %149 = vst.msk [vmem:[#allocation2 + $0x1fa] sm:$0xff] %vm106, 0.0
  %150 = vst.msk [vmem:[#allocation2 + $0x202] sm:$0xff] %vm106, 0.0
  %151 = vst.msk [vmem:[#allocation2 + $0x212] sm:$0xff] %vm106, 0.0
  %152 = vst.msk [vmem:[#allocation2 + $0x21a] sm:$0xff] %vm106, 0.0
  %153 = vst.msk [vmem:[#allocation2 + $0x22a] sm:$0xff] %vm106, 0.0
  %154 = vst.msk [vmem:[#allocation2 + $0x232] sm:$0xff] %vm106, 0.0
  %v155 = vld [vmem:[%s0] sm:$0xff]
  %v156 = vld [vmem:[%s0 + $0x8] sm:$0xff]
  %v157 = vld [vmem:[%s0 + $0x10] sm:$0xff]
  %v158 = vld [vmem:[%s0 + $0x18] sm:$0xff]
  %v159 = vld [vmem:[%s0 + $0x20] sm:$0xff]
  %v160 = vld [vmem:[%s0 + $0x28] sm:$0xff]
  %v161 = vld [vmem:[%s0 + $0x30] sm:$0xff]
  %v162 = vld [vmem:[%s0 + $0x38] sm:$0xff]
  %v163 = vld [vmem:[%s0 + $0x40] sm:$0xff]
  %v164 = vld [vmem:[%s0 + $0x48] sm:$0xff]
  %v165 = vld [vmem:[%s0 + $0x50] sm:$0xff]
  %v166 = vld [vmem:[%s0 + $0x58] sm:$0xff]
  %v167 = vld [vmem:[%s0 + $0x60] sm:$0xff]
  %v168 = vld [vmem:[%s0 + $0x68] sm:$0xff]
  %v169 = vld [vmem:[%s0 + $0x70] sm:$0xff]
  %v170 = vld [vmem:[%s0 + $0x78] sm:$0xff]
  %v171 = vld [vmem:[%s0 + $0x80] sm:$0xff]
  %v172 = vld [vmem:[%s0 + $0x88] sm:$0xff]
  %v173 = vld [vmem:[%s0 + $0x90] sm:$0xff]
  %v174 = vld [vmem:[%s0 + $0x98] sm:$0xff]
  %v175 = vld [vmem:[%s0 + $0xa0] sm:$0xff]
  %v176 = vld [vmem:[%s0 + $0xa8] sm:$0xff]
  %v177 = vld [vmem:[%s0 + $0xb0] sm:$0xff]
  %v178 = vld [vmem:[%s0 + $0xb8] sm:$0xff]
  %v179 = vld [vmem:[%s0 + $0xc0] sm:$0xff]
  %v180 = vld [vmem:[%s0 + $0xc8] sm:$0xff]
  %v181 = vld [vmem:[%s0 + $0xd0] sm:$0xff]
  %v182 = vld [vmem:[%s0 + $0xd8] sm:$0xff]
  %v183 = vld [vmem:[%s0 + $0xe0] sm:$0xff]
  %v184 = vld [vmem:[%s0 + $0xe8] sm:$0xff]
  %v185 = vld [vmem:[%s0 + $0xf0] sm:$0xff]
  %v186 = vld [vmem:[%s0 + $0xf8] sm:$0xff]
  %v187 = vld [vmem:[%s0 + $0x100] sm:$0xff]
  %v188 = vld [vmem:[%s0 + $0x108] sm:$0xff]
  %v189 = vld [vmem:[%s0 + $0x110] sm:$0xff]
  %v190 = vld [vmem:[%s0 + $0x118] sm:$0xff]
  %v191 = vld [vmem:[%s0 + $0x120] sm:$0xff]
  %v192 = vld [vmem:[%s0 + $0x128] sm:$0xff]
  %v193 = vld [vmem:[%s0 + $0x130] sm:$0xff]
  %v194 = vld [vmem:[%s0 + $0x138] sm:$0xff]
  %v195 = vld [vmem:[%s0 + $0x140] sm:$0xff]
  %v196 = vld [vmem:[%s0 + $0x148] sm:$0xff]
  %v197 = vld [vmem:[%s0 + $0x150] sm:$0xff]
  %v198 = vld [vmem:[%s0 + $0x158] sm:$0xff]
  %v199 = vld [vmem:[%s0 + $0x160] sm:$0xff]
  %v200 = vld [vmem:[%s0 + $0x168] sm:$0xff]
  %v201 = vld [vmem:[%s0 + $0x170] sm:$0xff]
  %v202 = vld [vmem:[%s0 + $0x178] sm:$0xff]
  %251 = vrot.lane.b32.xlu0 %v155, 2
  %v252 = vpop.permute.xlu0 %251
  %253 = vrot.lane.b32.xlu0 %v156, 2
  %v254 = vpop.permute.xlu0 %253
  %255 = vrot.lane.b32.xlu0 %v157, 2
  %v256 = vpop.permute.xlu0 %255
  %257 = vrot.lane.b32.xlu0 %v158, 2
  %v258 = vpop.permute.xlu0 %257
  %259 = vrot.lane.b32.xlu0 %v159, 2
  %v260 = vpop.permute.xlu0 %259
  %261 = vrot.lane.b32.xlu0 %v160, 2
  %v262 = vpop.permute.xlu0 %261
  %263 = vrot.lane.b32.xlu0 %v161, 2
  %v264 = vpop.permute.xlu0 %263
  %265 = vrot.lane.b32.xlu0 %v162, 2
  %v266 = vpop.permute.xlu0 %265
  %267 = vrot.lane.b32.xlu0 %v163, 2
  %v268 = vpop.permute.xlu0 %267
  %269 = vrot.lane.b32.xlu0 %v164, 2
  %v270 = vpop.permute.xlu0 %269
  %271 = vrot.lane.b32.xlu0 %v165, 2
  %v272 = vpop.permute.xlu0 %271
  %273 = vrot.lane.b32.xlu0 %v166, 2
  %v274 = vpop.permute.xlu0 %273
  %275 = vrot.lane.b32.xlu0 %v167, 2
  %v276 = vpop.permute.xlu0 %275
  %277 = vrot.lane.b32.xlu0 %v168, 2
  %v278 = vpop.permute.xlu0 %277
  %279 = vrot.lane.b32.xlu0 %v169, 2
  %v280 = vpop.permute.xlu0 %279
  %281 = vrot.lane.b32.xlu0 %v170, 2
  %v282 = vpop.permute.xlu0 %281
  %283 = vrot.lane.b32.xlu0 %v171, 2
  %v284 = vpop.permute.xlu0 %283
  %285 = vrot.lane.b32.xlu0 %v172, 2
  %v286 = vpop.permute.xlu0 %285
  %287 = vrot.lane.b32.xlu0 %v173, 2
  %v288 = vpop.permute.xlu0 %287
  %289 = vrot.lane.b32.xlu0 %v174, 2
  %v290 = vpop.permute.xlu0 %289
  %291 = vrot.lane.b32.xlu0 %v175, 2
  %v292 = vpop.permute.xlu0 %291
  %293 = vrot.lane.b32.xlu0 %v176, 2
  %v294 = vpop.permute.xlu0 %293
  %295 = vrot.lane.b32.xlu0 %v177, 2
  %v296 = vpop.permute.xlu0 %295
  %297 = vrot.lane.b32.xlu0 %v178, 2
  %v298 = vpop.permute.xlu0 %297
  %299 = vrot.lane.b32.xlu0 %v179, 2
  %v300 = vpop.permute.xlu0 %299
  %301 = vrot.lane.b32.xlu0 %v180, 2
  %v302 = vpop.permute.xlu0 %301
  %303 = vrot.lane.b32.xlu0 %v181, 2
  %v304 = vpop.permute.xlu0 %303
  %305 = vrot.lane.b32.xlu0 %v182, 2
  %v306 = vpop.permute.xlu0 %305
  %307 = vrot.lane.b32.xlu0 %v183, 2
  %v308 = vpop.permute.xlu0 %307
  %309 = vrot.lane.b32.xlu0 %v184, 2
  %v310 = vpop.permute.xlu0 %309
  %311 = vrot.lane.b32.xlu0 %v185, 2
  %v312 = vpop.permute.xlu0 %311
  %313 = vrot.lane.b32.xlu0 %v186, 2
  %v314 = vpop.permute.xlu0 %313
  %315 = vrot.lane.b32.xlu0 %v187, 2
  %v316 = vpop.permute.xlu0 %315
  %317 = vrot.lane.b32.xlu0 %v188, 2
  %v318 = vpop.permute.xlu0 %317
  %319 = vrot.lane.b32.xlu0 %v189, 2
  %v320 = vpop.permute.xlu0 %319
  %321 = vrot.lane.b32.xlu0 %v190, 2
  %v322 = vpop.permute.xlu0 %321
  %323 = vrot.lane.b32.xlu0 %v191, 2
  %v324 = vpop.permute.xlu0 %323
  %325 = vrot.lane.b32.xlu0 %v192, 2
  %v326 = vpop.permute.xlu0 %325
  %327 = vrot.lane.b32.xlu0 %v193, 2
  %v328 = vpop.permute.xlu0 %327
  %329 = vrot.lane.b32.xlu0 %v194, 2
  %v330 = vpop.permute.xlu0 %329
  %331 = vrot.lane.b32.xlu0 %v195, 2
  %v332 = vpop.permute.xlu0 %331
  %333 = vrot.lane.b32.xlu0 %v196, 2
  %v334 = vpop.permute.xlu0 %333
  %335 = vrot.lane.b32.xlu0 %v197, 2
  %v336 = vpop.permute.xlu0 %335
  %337 = vrot.lane.b32.xlu0 %v198, 2
  %v338 = vpop.permute.xlu0 %337
  %339 = vrot.lane.b32.xlu0 %v199, 2
  %v340 = vpop.permute.xlu0 %339
  %341 = vrot.lane.b32.xlu0 %v200, 2
  %v342 = vpop.permute.xlu0 %341
  %343 = vrot.lane.b32.xlu0 %v201, 2
  %v344 = vpop.permute.xlu0 %343
  %345 = vrot.lane.b32.xlu0 %v202, 2
  %v346 = vpop.permute.xlu0 %345
  %vm395 = vcmask 146448
  %396 = vst.msk [vmem:[#allocation2 + $0x2] sm:$0xff] %vm395, %v252
  %397 = vst.msk [vmem:[#allocation2 + $0xa] sm:$0xff] %vm395, %v254
  %398 = vst.msk [vmem:[#allocation2 + $0x1a] sm:$0xff] %vm395, %v256
  %399 = vst.msk [vmem:[#allocation2 + $0x22] sm:$0xff] %vm395, %v258
  %400 = vst.msk [vmem:[#allocation2 + $0x32] sm:$0xff] %vm395, %v260
  %401 = vst.msk [vmem:[#allocation2 + $0x3a] sm:$0xff] %vm395, %v262
  %402 = vst.msk [vmem:[#allocation2 + $0x4a] sm:$0xff] %vm395, %v264
  %403 = vst.msk [vmem:[#allocation2 + $0x52] sm:$0xff] %vm395, %v266
  %404 = vst.msk [vmem:[#allocation2 + $0x62] sm:$0xff] %vm395, %v268
  %405 = vst.msk [vmem:[#allocation2 + $0x6a] sm:$0xff] %vm395, %v270
  %406 = vst.msk [vmem:[#allocation2 + $0x7a] sm:$0xff] %vm395, %v272
  %407 = vst.msk [vmem:[#allocation2 + $0x82] sm:$0xff] %vm395, %v274
  %408 = vst.msk [vmem:[#allocation2 + $0x92] sm:$0xff] %vm395, %v276
  %409 = vst.msk [vmem:[#allocation2 + $0x9a] sm:$0xff] %vm395, %v278
  %410 = vst.msk [vmem:[#allocation2 + $0xaa] sm:$0xff] %vm395, %v280
  %411 = vst.msk [vmem:[#allocation2 + $0xb2] sm:$0xff] %vm395, %v282
  %412 = vst.msk [vmem:[#allocation2 + $0xc2] sm:$0xff] %vm395, %v284
  %413 = vst.msk [vmem:[#allocation2 + $0xca] sm:$0xff] %vm395, %v286
  %414 = vst.msk [vmem:[#allocation2 + $0xda] sm:$0xff] %vm395, %v288
  %415 = vst.msk [vmem:[#allocation2 + $0xe2] sm:$0xff] %vm395, %v290
  %416 = vst.msk [vmem:[#allocation2 + $0xf2] sm:$0xff] %vm395, %v292
  %417 = vst.msk [vmem:[#allocation2 + $0xfa] sm:$0xff] %vm395, %v294
  %418 = vst.msk [vmem:[#allocation2 + $0x10a] sm:$0xff] %vm395, %v296
  %419 = vst.msk [vmem:[#allocation2 + $0x112] sm:$0xff] %vm395, %v298
  %420 = vst.msk [vmem:[#allocation2 + $0x122] sm:$0xff] %vm395, %v300
  %421 = vst.msk [vmem:[#allocation2 + $0x12a] sm:$0xff] %vm395, %v302
  %422 = vst.msk [vmem:[#allocation2 + $0x13a] sm:$0xff] %vm395, %v304
  %423 = vst.msk [vmem:[#allocation2 + $0x142] sm:$0xff] %vm395, %v306
  %424 = vst.msk [vmem:[#allocation2 + $0x152] sm:$0xff] %vm395, %v308
  %425 = vst.msk [vmem:[#allocation2 + $0x15a] sm:$0xff] %vm395, %v310
  %426 = vst.msk [vmem:[#allocation2 + $0x16a] sm:$0xff] %vm395, %v312
  %427 = vst.msk [vmem:[#allocation2 + $0x172] sm:$0xff] %vm395, %v314
  %428 = vst.msk [vmem:[#allocation2 + $0x182] sm:$0xff] %vm395, %v316
  %429 = vst.msk [vmem:[#allocation2 + $0x18a] sm:$0xff] %vm395, %v318
  %430 = vst.msk [vmem:[#allocation2 + $0x19a] sm:$0xff] %vm395, %v320
  %431 = vst.msk [vmem:[#allocation2 + $0x1a2] sm:$0xff] %vm395, %v322
  %432 = vst.msk [vmem:[#allocation2 + $0x1b2] sm:$0xff] %vm395, %v324
  %433 = vst.msk [vmem:[#allocation2 + $0x1ba] sm:$0xff] %vm395, %v326
  %434 = vst.msk [vmem:[#allocation2 + $0x1ca] sm:$0xff] %vm395, %v328
  %435 = vst.msk [vmem:[#allocation2 + $0x1d2] sm:$0xff] %vm395, %v330
  %436 = vst.msk [vmem:[#allocation2 + $0x1e2] sm:$0xff] %vm395, %v332
  %437 = vst.msk [vmem:[#allocation2 + $0x1ea] sm:$0xff] %vm395, %v334
  %438 = vst.msk [vmem:[#allocation2 + $0x1fa] sm:$0xff] %vm395, %v336
  %439 = vst.msk [vmem:[#allocation2 + $0x202] sm:$0xff] %vm395, %v338
  %440 = vst.msk [vmem:[#allocation2 + $0x212] sm:$0xff] %vm395, %v340
  %441 = vst.msk [vmem:[#allocation2 + $0x21a] sm:$0xff] %vm395, %v342
  %442 = vst.msk [vmem:[#allocation2 + $0x22a] sm:$0xff] %vm395, %v344
  %443 = vst.msk [vmem:[#allocation2 + $0x232] sm:$0xff] %vm395, %v346
  %v444 = vld [vmem:[#allocation2] sm:$0xff]
  %v445 = vld [vmem:[#allocation2 + $0x8] sm:$0xff]
  %v446 = vld [vmem:[#allocation2 + $0x18] sm:$0xff]
  %v447 = vld [vmem:[#allocation2 + $0x20] sm:$0xff]
  %v448 = vld [vmem:[#allocation2 + $0x30] sm:$0xff]
  %v449 = vld [vmem:[#allocation2 + $0x38] sm:$0xff]
  %v450 = vld [vmem:[#allocation2 + $0x48] sm:$0xff]
  %v451 = vld [vmem:[#allocation2 + $0x50] sm:$0xff]
  %v452 = vld [vmem:[#allocation2 + $0x60] sm:$0xff]
  %v453 = vld [vmem:[#allocation2 + $0x68] sm:$0xff]
  %v454 = vld [vmem:[#allocation2 + $0x78] sm:$0xff]
  %v455 = vld [vmem:[#allocation2 + $0x80] sm:$0xff]
  %v456 = vld [vmem:[#allocation2 + $0x90] sm:$0xff]
  %v457 = vld [vmem:[#allocation2 + $0x98] sm:$0xff]
  %v458 = vld [vmem:[#allocation2 + $0xa8] sm:$0xff]
  %v459 = vld [vmem:[#allocation2 + $0xb0] sm:$0xff]
  %v460 = vld [vmem:[#allocation2 + $0xc0] sm:$0xff]
  %v461 = vld [vmem:[#allocation2 + $0xc8] sm:$0xff]
  %v462 = vld [vmem:[#allocation2 + $0xd8] sm:$0xff]
  %v463 = vld [vmem:[#allocation2 + $0xe0] sm:$0xff]
  %v464 = vld [vmem:[#allocation2 + $0xf0] sm:$0xff]
  %v465 = vld [vmem:[#allocation2 + $0xf8] sm:$0xff]
  %v466 = vld [vmem:[#allocation2 + $0x108] sm:$0xff]
  %v467 = vld [vmem:[#allocation2 + $0x110] sm:$0xff]
  %v468 = vld [vmem:[#allocation2 + $0x120] sm:$0xff]
  %v469 = vld [vmem:[#allocation2 + $0x128] sm:$0xff]
  %v470 = vld [vmem:[#allocation2 + $0x138] sm:$0xff]
  %v471 = vld [vmem:[#allocation2 + $0x140] sm:$0xff]
  %v472 = vld [vmem:[#allocation2 + $0x150] sm:$0xff]
  %v473 = vld [vmem:[#allocation2 + $0x158] sm:$0xff]
  %v474 = vld [vmem:[#allocation2 + $0x168] sm:$0xff]
  %v475 = vld [vmem:[#allocation2 + $0x170] sm:$0xff]
  %v476 = vld [vmem:[#allocation2 + $0x180] sm:$0xff]
  %v477 = vld [vmem:[#allocation2 + $0x188] sm:$0xff]
  %v478 = vld [vmem:[#allocation2 + $0x198] sm:$0xff]
  %v479 = vld [vmem:[#allocation2 + $0x1a0] sm:$0xff]
  %v480 = vld [vmem:[#allocation2 + $0x1b0] sm:$0xff]
  %v481 = vld [vmem:[#allocation2 + $0x1b8] sm:$0xff]
  %v482 = vld [vmem:[#allocation2 + $0x1c8] sm:$0xff]
  %v483 = vld [vmem:[#allocation2 + $0x1d0] sm:$0xff]
  %v484 = vld [vmem:[#allocation2 + $0x1e0] sm:$0xff]
  %v485 = vld [vmem:[#allocation2 + $0x1e8] sm:$0xff]
  %v486 = vld [vmem:[#allocation2 + $0x1f8] sm:$0xff]
  %v487 = vld [vmem:[#allocation2 + $0x200] sm:$0xff]
  %v488 = vld [vmem:[#allocation2 + $0x210] sm:$0xff]
  %v489 = vld [vmem:[#allocation2 + $0x218] sm:$0xff]
  %v490 = vld [vmem:[#allocation2 + $0x228] sm:$0xff]
  %v491 = vld [vmem:[#allocation2 + $0x230] sm:$0xff]
  %v492 = vmul.f32 %v444, 0.054488685
  %v493 = vmul.f32 %v445, 0.054488685
  %v494 = vmul.f32 %v446, 0.054488685
  %v495 = vmul.f32 %v447, 0.054488685
  %v496 = vmul.f32 %v448, 0.054488685
  %v497 = vmul.f32 %v449, 0.054488685
  %v498 = vmul.f32 %v450, 0.054488685
  %v499 = vmul.f32 %v451, 0.054488685
  %v500 = vmul.f32 %v452, 0.054488685
  %v501 = vmul.f32 %v453, 0.054488685
  %v502 = vmul.f32 %v454, 0.054488685
  %v503 = vmul.f32 %v455, 0.054488685
  %v504 = vmul.f32 %v456, 0.054488685
  %v505 = vmul.f32 %v457, 0.054488685
  %v506 = vmul.f32 %v458, 0.054488685
  %v507 = vmul.f32 %v459, 0.054488685
  %v508 = vmul.f32 %v460, 0.054488685
  %v509 = vmul.f32 %v461, 0.054488685
  %v510 = vmul.f32 %v462, 0.054488685
  %v511 = vmul.f32 %v463, 0.054488685
  %v512 = vmul.f32 %v464, 0.054488685
  %v513 = vmul.f32 %v465, 0.054488685
  %v514 = vmul.f32 %v466, 0.054488685
  %v515 = vmul.f32 %v467, 0.054488685
  %v516 = vmul.f32 %v468, 0.054488685
  %v517 = vmul.f32 %v469, 0.054488685
  %v518 = vmul.f32 %v470, 0.054488685
  %v519 = vmul.f32 %v471, 0.054488685
  %v520 = vmul.f32 %v472, 0.054488685
  %v521 = vmul.f32 %v473, 0.054488685
  %v522 = vmul.f32 %v474, 0.054488685
  %v523 = vmul.f32 %v475, 0.054488685
  %v524 = vmul.f32 %v476, 0.054488685
  %v525 = vmul.f32 %v477, 0.054488685
  %v526 = vmul.f32 %v478, 0.054488685
  %v527 = vmul.f32 %v479, 0.054488685
  %v528 = vmul.f32 %v480, 0.054488685
  %v529 = vmul.f32 %v481, 0.054488685
  %v530 = vmul.f32 %v482, 0.054488685
  %v531 = vmul.f32 %v483, 0.054488685
  %v532 = vmul.f32 %v484, 0.054488685
  %v533 = vmul.f32 %v485, 0.054488685
  %v534 = vmul.f32 %v486, 0.054488685
  %v535 = vmul.f32 %v487, 0.054488685
  %v536 = vmul.f32 %v488, 0.054488685
  %v537 = vmul.f32 %v489, 0.054488685
  %v538 = vmul.f32 %v490, 0.054488685
  %v539 = vmul.f32 %v491, 0.054488685
  %v540 = vld [vmem:[#allocation2 + $0x1] sm:$0xff]
  %v541 = vld [vmem:[#allocation2 + $0x9] sm:$0xff]
  %v542 = vld [vmem:[#allocation2 + $0x19] sm:$0xff]
  %v543 = vld [vmem:[#allocation2 + $0x21] sm:$0xff]
  %v544 = vld [vmem:[#allocation2 + $0x31] sm:$0xff]
  %v545 = vld [vmem:[#allocation2 + $0x39] sm:$0xff]
  %v546 = vld [vmem:[#allocation2 + $0x49] sm:$0xff]
  %v547 = vld [vmem:[#allocation2 + $0x51] sm:$0xff]
  %v548 = vld [vmem:[#allocation2 + $0x61] sm:$0xff]
  %v549 = vld [vmem:[#allocation2 + $0x69] sm:$0xff]
  %v550 = vld [vmem:[#allocation2 + $0x79] sm:$0xff]
  %v551 = vld [vmem:[#allocation2 + $0x81] sm:$0xff]
  %v552 = vld [vmem:[#allocation2 + $0x91] sm:$0xff]
  %v553 = vld [vmem:[#allocation2 + $0x99] sm:$0xff]
  %v554 = vld [vmem:[#allocation2 + $0xa9] sm:$0xff]
  %v555 = vld [vmem:[#allocation2 + $0xb1] sm:$0xff]
  %v556 = vld [vmem:[#allocation2 + $0xc1] sm:$0xff]
  %v557 = vld [vmem:[#allocation2 + $0xc9] sm:$0xff]
  %v558 = vld [vmem:[#allocation2 + $0xd9] sm:$0xff]
  %v559 = vld [vmem:[#allocation2 + $0xe1] sm:$0xff]
  %v560 = vld [vmem:[#allocation2 + $0xf1] sm:$0xff]
  %v561 = vld [vmem:[#allocation2 + $0xf9] sm:$0xff]
  %v562 = vld [vmem:[#allocation2 + $0x109] sm:$0xff]
  %v563 = vld [vmem:[#allocation2 + $0x111] sm:$0xff]
  %v564 = vld [vmem:[#allocation2 + $0x121] sm:$0xff]
  %v565 = vld [vmem:[#allocation2 + $0x129] sm:$0xff]
  %v566 = vld [vmem:[#allocation2 + $0x139] sm:$0xff]
  %v567 = vld [vmem:[#allocation2 + $0x141] sm:$0xff]
  %v568 = vld [vmem:[#allocation2 + $0x151] sm:$0xff]
  %v569 = vld [vmem:[#allocation2 + $0x159] sm:$0xff]
  %v570 = vld [vmem:[#allocation2 + $0x169] sm:$0xff]
  %v571 = vld [vmem:[#allocation2 + $0x171] sm:$0xff]
  %v572 = vld [vmem:[#allocation2 + $0x181] sm:$0xff]
  %v573 = vld [vmem:[#allocation2 + $0x189] sm:$0xff]
  %v574 = vld [vmem:[#allocation2 + $0x199] sm:$0xff]
  %v575 = vld [vmem:[#allocation2 + $0x1a1] sm:$0xff]
  %v576 = vld [vmem:[#allocation2 + $0x1b1] sm:$0xff]
  %v577 = vld [vmem:[#allocation2 + $0x1b9] sm:$0xff]
  %v578 = vld [vmem:[#allocation2 + $0x1c9] sm:$0xff]
  %v579 = vld [vmem:[#allocation2 + $0x1d1] sm:$0xff]
  %v580 = vld [vmem:[#allocation2 + $0x1e1] sm:$0xff]
  %v581 = vld [vmem:[#allocation2 + $0x1e9] sm:$0xff]
  %v582 = vld [vmem:[#allocation2 + $0x1f9] sm:$0xff]
  %v583 = vld [vmem:[#allocation2 + $0x201] sm:$0xff]
  %v584 = vld [vmem:[#allocation2 + $0x211] sm:$0xff]
  %v585 = vld [vmem:[#allocation2 + $0x219] sm:$0xff]
  %v586 = vld [vmem:[#allocation2 + $0x229] sm:$0xff]
  %v587 = vld [vmem:[#allocation2 + $0x231] sm:$0xff]
  %v588 = vmul.f32 %v540, 0.24420135
  %v589 = vmul.f32 %v541, 0.24420135
  %v590 = vmul.f32 %v542, 0.24420135
  %v591 = vmul.f32 %v543, 0.24420135
  %v592 = vmul.f32 %v544, 0.24420135
  %v593 = vmul.f32 %v545, 0.24420135
  %v594 = vmul.f32 %v546, 0.24420135
  %v595 = vmul.f32 %v547, 0.24420135
  %v596 = vmul.f32 %v548, 0.24420135
  %v597 = vmul.f32 %v549, 0.24420135
  %v598 = vmul.f32 %v550, 0.24420135
  %v599 = vmul.f32 %v551, 0.24420135
  %v600 = vmul.f32 %v552, 0.24420135
  %v601 = vmul.f32 %v553, 0.24420135
  %v602 = vmul.f32 %v554, 0.24420135
  %v603 = vmul.f32 %v555, 0.24420135
  %v604 = vmul.f32 %v556, 0.24420135
  %v605 = vmul.f32 %v557, 0.24420135
  %v606 = vmul.f32 %v558, 0.24420135
  %v607 = vmul.f32 %v559, 0.24420135
  %v608 = vmul.f32 %v560, 0.24420135
  %v609 = vmul.f32 %v561, 0.24420135
  %v610 = vmul.f32 %v562, 0.24420135
  %v611 = vmul.f32 %v563, 0.24420135
  %v612 = vmul.f32 %v564, 0.24420135
  %v613 = vmul.f32 %v565, 0.24420135
  %v614 = vmul.f32 %v566, 0.24420135
  %v615 = vmul.f32 %v567, 0.24420135
  %v616 = vmul.f32 %v568, 0.24420135
  %v617 = vmul.f32 %v569, 0.24420135
  %v618 = vmul.f32 %v570, 0.24420135
  %v619 = vmul.f32 %v571, 0.24420135
  %v620 = vmul.f32 %v572, 0.24420135
  %v621 = vmul.f32 %v573, 0.24420135
  %v622 = vmul.f32 %v574, 0.24420135
  %v623 = vmul.f32 %v575, 0.24420135
  %v624 = vmul.f32 %v576, 0.24420135
  %v625 = vmul.f32 %v577, 0.24420135
  %v626 = vmul.f32 %v578, 0.24420135
  %v627 = vmul.f32 %v579, 0.24420135
  %v628 = vmul.f32 %v580, 0.24420135
  %v629 = vmul.f32 %v581, 0.24420135
  %v630 = vmul.f32 %v582, 0.24420135
  %v631 = vmul.f32 %v583, 0.24420135
  %v632 = vmul.f32 %v584, 0.24420135
  %v633 = vmul.f32 %v585, 0.24420135
  %v634 = vmul.f32 %v586, 0.24420135
  %v635 = vmul.f32 %v587, 0.24420135
  %v636 = vadd.f32 %v492, %v588
  %v637 = vadd.f32 %v493, %v589
  %v638 = vadd.f32 %v494, %v590
  %v639 = vadd.f32 %v495, %v591
  %v640 = vadd.f32 %v496, %v592
  %v641 = vadd.f32 %v497, %v593
  %v642 = vadd.f32 %v498, %v594
  %v643 = vadd.f32 %v499, %v595
  %v644 = vadd.f32 %v500, %v596
  %v645 = vadd.f32 %v501, %v597
  %v646 = vadd.f32 %v502, %v598
  %v647 = vadd.f32 %v503, %v599
  %v648 = vadd.f32 %v504, %v600
  %v649 = vadd.f32 %v505, %v601
  %v650 = vadd.f32 %v506, %v602
  %v651 = vadd.f32 %v507, %v603
  %v652 = vadd.f32 %v508, %v604
  %v653 = vadd.f32 %v509, %v605
  %v654 = vadd.f32 %v510, %v606
  %v655 = vadd.f32 %v511, %v607
  %v656 = vadd.f32 %v512, %v608
  %v657 = vadd.f32 %v513, %v609
  %v658 = vadd.f32 %v514, %v610
  %v659 = vadd.f32 %v515, %v611
  %v660 = vadd.f32 %v516, %v612
  %v661 = vadd.f32 %v517, %v613
  %v662 = vadd.f32 %v518, %v614
  %v663 = vadd.f32 %v519, %v615
  %v664 = vadd.f32 %v520, %v616
  %v665 = vadd.f32 %v521, %v617
  %v666 = vadd.f32 %v522, %v618
  %v667 = vadd.f32 %v523, %v619
  %v668 = vadd.f32 %v524, %v620
  %v669 = vadd.f32 %v525, %v621
  %v670 = vadd.f32 %v526, %v622
  %v671 = vadd.f32 %v527, %v623
  %v672 = vadd.f32 %v528, %v624
  %v673 = vadd.f32 %v529, %v625
  %v674 = vadd.f32 %v530, %v626
  %v675 = vadd.f32 %v531, %v627
  %v676 = vadd.f32 %v532, %v628
  %v677 = vadd.f32 %v533, %v629
  %v678 = vadd.f32 %v534, %v630
  %v679 = vadd.f32 %v535, %v631
  %v680 = vadd.f32 %v536, %v632
  %v681 = vadd.f32 %v537, %v633
  %v682 = vadd.f32 %v538, %v634
  %v683 = vadd.f32 %v539, %v635
  %v684 = vld [vmem:[#allocation2 + $0x2] sm:$0xff]
  %v685 = vld [vmem:[#allocation2 + $0xa] sm:$0xff]
  %v686 = vld [vmem:[#allocation2 + $0x1a] sm:$0xff]
  %v687 = vld [vmem:[#allocation2 + $0x22] sm:$0xff]
  %v688 = vld [vmem:[#allocation2 + $0x32] sm:$0xff]
  %v689 = vld [vmem:[#allocation2 + $0x3a] sm:$0xff]
  %v690 = vld [vmem:[#allocation2 + $0x4a] sm:$0xff]
  %v691 = vld [vmem:[#allocation2 + $0x52] sm:$0xff]
  %v692 = vld [vmem:[#allocation2 + $0x62] sm:$0xff]
  %v693 = vld [vmem:[#allocation2 + $0x6a] sm:$0xff]
  %v694 = vld [vmem:[#allocation2 + $0x7a] sm:$0xff]
  %v695 = vld [vmem:[#allocation2 + $0x82] sm:$0xff]
  %v696 = vld [vmem:[#allocation2 + $0x92] sm:$0xff]
  %v697 = vld [vmem:[#allocation2 + $0x9a] sm:$0xff]
  %v698 = vld [vmem:[#allocation2 + $0xaa] sm:$0xff]
  %v699 = vld [vmem:[#allocation2 + $0xb2] sm:$0xff]
  %v700 = vld [vmem:[#allocation2 + $0xc2] sm:$0xff]
  %v701 = vld [vmem:[#allocation2 + $0xca] sm:$0xff]
  %v702 = vld [vmem:[#allocation2 + $0xda] sm:$0xff]
  %v703 = vld [vmem:[#allocation2 + $0xe2] sm:$0xff]
  %v704 = vld [vmem:[#allocation2 + $0xf2] sm:$0xff]
  %v705 = vld [vmem:[#allocation2 + $0xfa] sm:$0xff]
  %v706 = vld [vmem:[#allocation2 + $0x10a] sm:$0xff]
  %v707 = vld [vmem:[#allocation2 + $0x112] sm:$0xff]
  %v708 = vld [vmem:[#allocation2 + $0x122] sm:$0xff]
  %v709 = vld [vmem:[#allocation2 + $0x12a] sm:$0xff]
  %v710 = vld [vmem:[#allocation2 + $0x13a] sm:$0xff]
  %v711 = vld [vmem:[#allocation2 + $0x142] sm:$0xff]
  %v712 = vld [vmem:[#allocation2 + $0x152] sm:$0xff]
  %v713 = vld [vmem:[#allocation2 + $0x15a] sm:$0xff]
  %v714 = vld [vmem:[#allocation2 + $0x16a] sm:$0xff]
  %v715 = vld [vmem:[#allocation2 + $0x172] sm:$0xff]
  %v716 = vld [vmem:[#allocation2 + $0x182] sm:$0xff]
  %v717 = vld [vmem:[#allocation2 + $0x18a] sm:$0xff]
  %v718 = vld [vmem:[#allocation2 + $0x19a] sm:$0xff]
  %v719 = vld [vmem:[#allocation2 + $0x1a2] sm:$0xff]
  %v720 = vld [vmem:[#allocation2 + $0x1b2] sm:$0xff]
  %v721 = vld [vmem:[#allocation2 + $0x1ba] sm:$0xff]
  %v722 = vld [vmem:[#allocation2 + $0x1ca] sm:$0xff]
  %v723 = vld [vmem:[#allocation2 + $0x1d2] sm:$0xff]
  %v724 = vld [vmem:[#allocation2 + $0x1e2] sm:$0xff]
  %v725 = vld [vmem:[#allocation2 + $0x1ea] sm:$0xff]
  %v726 = vld [vmem:[#allocation2 + $0x1fa] sm:$0xff]
  %v727 = vld [vmem:[#allocation2 + $0x202] sm:$0xff]
  %v728 = vld [vmem:[#allocation2 + $0x212] sm:$0xff]
  %v729 = vld [vmem:[#allocation2 + $0x21a] sm:$0xff]
  %v730 = vld [vmem:[#allocation2 + $0x22a] sm:$0xff]
  %v731 = vld [vmem:[#allocation2 + $0x232] sm:$0xff]
  %v732 = vmul.f32 %v684, 0.40261996
  %v733 = vmul.f32 %v685, 0.40261996
  %v734 = vmul.f32 %v686, 0.40261996
  %v735 = vmul.f32 %v687, 0.40261996
  %v736 = vmul.f32 %v688, 0.40261996
  %v737 = vmul.f32 %v689, 0.40261996
  %v738 = vmul.f32 %v690, 0.40261996
  %v739 = vmul.f32 %v691, 0.40261996
  %v740 = vmul.f32 %v692, 0.40261996
  %v741 = vmul.f32 %v693, 0.40261996
  %v742 = vmul.f32 %v694, 0.40261996
  %v743 = vmul.f32 %v695, 0.40261996
  %v744 = vmul.f32 %v696, 0.40261996
  %v745 = vmul.f32 %v697, 0.40261996
  %v746 = vmul.f32 %v698, 0.40261996
  %v747 = vmul.f32 %v699, 0.40261996
  %v748 = vmul.f32 %v700, 0.40261996
  %v749 = vmul.f32 %v701, 0.40261996
  %v750 = vmul.f32 %v702, 0.40261996
  %v751 = vmul.f32 %v703, 0.40261996
  %v752 = vmul.f32 %v704, 0.40261996
  %v753 = vmul.f32 %v705, 0.40261996
  %v754 = vmul.f32 %v706, 0.40261996
  %v755 = vmul.f32 %v707, 0.40261996
  %v756 = vmul.f32 %v708, 0.40261996
  %v757 = vmul.f32 %v709, 0.40261996
  %v758 = vmul.f32 %v710, 0.40261996
  %v759 = vmul.f32 %v711, 0.40261996
  %v760 = vmul.f32 %v712, 0.40261996
  %v761 = vmul.f32 %v713, 0.40261996
  %v762 = vmul.f32 %v714, 0.40261996
  %v763 = vmul.f32 %v715, 0.40261996
  %v764 = vmul.f32 %v716, 0.40261996
  %v765 = vmul.f32 %v717, 0.40261996
  %v766 = vmul.f32 %v718, 0.40261996
  %v767 = vmul.f32 %v719, 0.40261996
  %v768 = vmul.f32 %v720, 0.40261996
  %v769 = vmul.f32 %v721, 0.40261996
  %v770 = vmul.f32 %v722, 0.40261996
  %v771 = vmul.f32 %v723, 0.40261996
  %v772 = vmul.f32 %v724, 0.40261996
  %v773 = vmul.f32 %v725, 0.40261996
  %v774 = vmul.f32 %v726, 0.40261996
  %v775 = vmul.f32 %v727, 0.40261996
  %v776 = vmul.f32 %v728, 0.40261996
  %v777 = vmul.f32 %v729, 0.40261996
  %v778 = vmul.f32 %v730, 0.40261996
  %v779 = vmul.f32 %v731, 0.40261996
  %v780 = vadd.f32 %v636, %v732
  %v781 = vadd.f32 %v637, %v733
  %v782 = vadd.f32 %v638, %v734
  %v783 = vadd.f32 %v639, %v735
  %v784 = vadd.f32 %v640, %v736
  %v785 = vadd.f32 %v641, %v737
  %v786 = vadd.f32 %v642, %v738
  %v787 = vadd.f32 %v643, %v739
  %v788 = vadd.f32 %v644, %v740
  %v789 = vadd.f32 %v645, %v741
  %v790 = vadd.f32 %v646, %v742
  %v791 = vadd.f32 %v647, %v743
  %v792 = vadd.f32 %v648, %v744
  %v793 = vadd.f32 %v649, %v745
  %v794 = vadd.f32 %v650, %v746
  %v795 = vadd.f32 %v651, %v747
  %v796 = vadd.f32 %v652, %v748
  %v797 = vadd.f32 %v653, %v749
  %v798 = vadd.f32 %v654, %v750
  %v799 = vadd.f32 %v655, %v751
  %v800 = vadd.f32 %v656, %v752
  %v801 = vadd.f32 %v657, %v753
  %v802 = vadd.f32 %v658, %v754
  %v803 = vadd.f32 %v659, %v755
  %v804 = vadd.f32 %v660, %v756
  %v805 = vadd.f32 %v661, %v757
  %v806 = vadd.f32 %v662, %v758
  %v807 = vadd.f32 %v663, %v759
  %v808 = vadd.f32 %v664, %v760
  %v809 = vadd.f32 %v665, %v761
  %v810 = vadd.f32 %v666, %v762
  %v811 = vadd.f32 %v667, %v763
  %v812 = vadd.f32 %v668, %v764
  %v813 = vadd.f32 %v669, %v765
  %v814 = vadd.f32 %v670, %v766
  %v815 = vadd.f32 %v671, %v767
  %v816 = vadd.f32 %v672, %v768
  %v817 = vadd.f32 %v673, %v769
  %v818 = vadd.f32 %v674, %v770
  %v819 = vadd.f32 %v675, %v771
  %v820 = vadd.f32 %v676, %v772
  %v821 = vadd.f32 %v677, %v773
  %v822 = vadd.f32 %v678, %v774
  %v823 = vadd.f32 %v679, %v775
  %v824 = vadd.f32 %v680, %v776
  %v825 = vadd.f32 %v681, %v777
  %v826 = vadd.f32 %v682, %v778
  %v827 = vadd.f32 %v683, %v779
  %v828 = vld [vmem:[#allocation2 + $0x3] sm:$0xff]
  %v829 = vld [vmem:[#allocation2 + $0xb] sm:$0xff]
  %v830 = vld [vmem:[#allocation2 + $0x1b] sm:$0xff]
  %v831 = vld [vmem:[#allocation2 + $0x23] sm:$0xff]
  %v832 = vld [vmem:[#allocation2 + $0x33] sm:$0xff]
  %v833 = vld [vmem:[#allocation2 + $0x3b] sm:$0xff]
  %v834 = vld [vmem:[#allocation2 + $0x4b] sm:$0xff]
  %v835 = vld [vmem:[#allocation2 + $0x53] sm:$0xff]
  %v836 = vld [vmem:[#allocation2 + $0x63] sm:$0xff]
  %v837 = vld [vmem:[#allocation2 + $0x6b] sm:$0xff]
  %v838 = vld [vmem:[#allocation2 + $0x7b] sm:$0xff]
  %v839 = vld [vmem:[#allocation2 + $0x83] sm:$0xff]
  %v840 = vld [vmem:[#allocation2 + $0x93] sm:$0xff]
  %v841 = vld [vmem:[#allocation2 + $0x9b] sm:$0xff]
  %v842 = vld [vmem:[#allocation2 + $0xab] sm:$0xff]
  %v843 = vld [vmem:[#allocation2 + $0xb3] sm:$0xff]
  %v844 = vld [vmem:[#allocation2 + $0xc3] sm:$0xff]
  %v845 = vld [vmem:[#allocation2 + $0xcb] sm:$0xff]
  %v846 = vld [vmem:[#allocation2 + $0xdb] sm:$0xff]
  %v847 = vld [vmem:[#allocation2 + $0xe3] sm:$0xff]
  %v848 = vld [vmem:[#allocation2 + $0xf3] sm:$0xff]
  %v849 = vld [vmem:[#allocation2 + $0xfb] sm:$0xff]
  %v850 = vld [vmem:[#allocation2 + $0x10b] sm:$0xff]
  %v851 = vld [vmem:[#allocation2 + $0x113] sm:$0xff]
  %v852 = vld [vmem:[#allocation2 + $0x123] sm:$0xff]
  %v853 = vld [vmem:[#allocation2 + $0x12b] sm:$0xff]
  %v854 = vld [vmem:[#allocation2 + $0x13b] sm:$0xff]
  %v855 = vld [vmem:[#allocation2 + $0x143] sm:$0xff]
  %v856 = vld [vmem:[#allocation2 + $0x153] sm:$0xff]
  %v857 = vld [vmem:[#allocation2 + $0x15b] sm:$0xff]
  %v858 = vld [vmem:[#allocation2 + $0x16b] sm:$0xff]
  %v859 = vld [vmem:[#allocation2 + $0x173] sm:$0xff]
  %v860 = vld [vmem:[#allocation2 + $0x183] sm:$0xff]
  %v861 = vld [vmem:[#allocation2 + $0x18b] sm:$0xff]
  %v862 = vld [vmem:[#allocation2 + $0x19b] sm:$0xff]
  %v863 = vld [vmem:[#allocation2 + $0x1a3] sm:$0xff]
  %v864 = vld [vmem:[#allocation2 + $0x1b3] sm:$0xff]
  %v865 = vld [vmem:[#allocation2 + $0x1bb] sm:$0xff]
  %v866 = vld [vmem:[#allocation2 + $0x1cb] sm:$0xff]
  %v867 = vld [vmem:[#allocation2 + $0x1d3] sm:$0xff]
  %v868 = vld [vmem:[#allocation2 + $0x1e3] sm:$0xff]
  %v869 = vld [vmem:[#allocation2 + $0x1eb] sm:$0xff]
  %v870 = vld [vmem:[#allocation2 + $0x1fb] sm:$0xff]
  %v871 = vld [vmem:[#allocation2 + $0x203] sm:$0xff]
  %v872 = vld [vmem:[#allocation2 + $0x213] sm:$0xff]
  %v873 = vld [vmem:[#allocation2 + $0x21b] sm:$0xff]
  %v874 = vld [vmem:[#allocation2 + $0x22b] sm:$0xff]
  %v875 = vld [vmem:[#allocation2 + $0x233] sm:$0xff]
  %v876 = vmul.f32 %v828, 0.24420135
  %v877 = vmul.f32 %v829, 0.24420135
  %v878 = vmul.f32 %v830, 0.24420135
  %v879 = vmul.f32 %v831, 0.24420135
  %v880 = vmul.f32 %v832, 0.24420135
  %v881 = vmul.f32 %v833, 0.24420135
  %v882 = vmul.f32 %v834, 0.24420135
  %v883 = vmul.f32 %v835, 0.24420135
  %v884 = vmul.f32 %v836, 0.24420135
  %v885 = vmul.f32 %v837, 0.24420135
  %v886 = vmul.f32 %v838, 0.24420135
  %v887 = vmul.f32 %v839, 0.24420135
  %v888 = vmul.f32 %v840, 0.24420135
  %v889 = vmul.f32 %v841, 0.24420135
  %v890 = vmul.f32 %v842, 0.24420135
  %v891 = vmul.f32 %v843, 0.24420135
  %v892 = vmul.f32 %v844, 0.24420135
  %v893 = vmul.f32 %v845, 0.24420135
  %v894 = vmul.f32 %v846, 0.24420135
  %v895 = vmul.f32 %v847, 0.24420135
  %v896 = vmul.f32 %v848, 0.24420135
  %v897 = vmul.f32 %v849, 0.24420135
  %v898 = vmul.f32 %v850, 0.24420135
  %v899 = vmul.f32 %v851, 0.24420135
  %v900 = vmul.f32 %v852, 0.24420135
  %v901 = vmul.f32 %v853, 0.24420135
  %v902 = vmul.f32 %v854, 0.24420135
  %v903 = vmul.f32 %v855, 0.24420135
  %v904 = vmul.f32 %v856, 0.24420135
  %v905 = vmul.f32 %v857, 0.24420135
  %v906 = vmul.f32 %v858, 0.24420135
  %v907 = vmul.f32 %v859, 0.24420135
  %v908 = vmul.f32 %v860, 0.24420135
  %v909 = vmul.f32 %v861, 0.24420135
  %v910 = vmul.f32 %v862, 0.24420135
  %v911 = vmul.f32 %v863, 0.24420135
  %v912 = vmul.f32 %v864, 0.24420135
  %v913 = vmul.f32 %v865, 0.24420135
  %v914 = vmul.f32 %v866, 0.24420135
  %v915 = vmul.f32 %v867, 0.24420135
  %v916 = vmul.f32 %v868, 0.24420135
  %v917 = vmul.f32 %v869, 0.24420135
  %v918 = vmul.f32 %v870, 0.24420135
  %v919 = vmul.f32 %v871, 0.24420135
  %v920 = vmul.f32 %v872, 0.24420135
  %v921 = vmul.f32 %v873, 0.24420135
  %v922 = vmul.f32 %v874, 0.24420135
  %v923 = vmul.f32 %v875, 0.24420135
  %v924 = vadd.f32 %v780, %v876
  %v925 = vadd.f32 %v781, %v877
  %v926 = vadd.f32 %v782, %v878
  %v927 = vadd.f32 %v783, %v879
  %v928 = vadd.f32 %v784, %v880
  %v929 = vadd.f32 %v785, %v881
  %v930 = vadd.f32 %v786, %v882
  %v931 = vadd.f32 %v787, %v883
  %v932 = vadd.f32 %v788, %v884
  %v933 = vadd.f32 %v789, %v885
  %v934 = vadd.f32 %v790, %v886
  %v935 = vadd.f32 %v791, %v887
  %v936 = vadd.f32 %v792, %v888
  %v937 = vadd.f32 %v793, %v889
  %v938 = vadd.f32 %v794, %v890
  %v939 = vadd.f32 %v795, %v891
  %v940 = vadd.f32 %v796, %v892
  %v941 = vadd.f32 %v797, %v893
  %v942 = vadd.f32 %v798, %v894
  %v943 = vadd.f32 %v799, %v895
  %v944 = vadd.f32 %v800, %v896
  %v945 = vadd.f32 %v801, %v897
  %v946 = vadd.f32 %v802, %v898
  %v947 = vadd.f32 %v803, %v899
  %v948 = vadd.f32 %v804, %v900
  %v949 = vadd.f32 %v805, %v901
  %v950 = vadd.f32 %v806, %v902
  %v951 = vadd.f32 %v807, %v903
  %v952 = vadd.f32 %v808, %v904
  %v953 = vadd.f32 %v809, %v905
  %v954 = vadd.f32 %v810, %v906
  %v955 = vadd.f32 %v811, %v907
  %v956 = vadd.f32 %v812, %v908
  %v957 = vadd.f32 %v813, %v909
  %v958 = vadd.f32 %v814, %v910
  %v959 = vadd.f32 %v815, %v911
  %v960 = vadd.f32 %v816, %v912
  %v961 = vadd.f32 %v817, %v913
  %v962 = vadd.f32 %v818, %v914
  %v963 = vadd.f32 %v819, %v915
  %v964 = vadd.f32 %v820, %v916
  %v965 = vadd.f32 %v821, %v917
  %v966 = vadd.f32 %v822, %v918
  %v967 = vadd.f32 %v823, %v919
  %v968 = vadd.f32 %v824, %v920
  %v969 = vadd.f32 %v825, %v921
  %v970 = vadd.f32 %v826, %v922
  %v971 = vadd.f32 %v827, %v923
  %v972 = vld [vmem:[#allocation2 + $0x4] sm:$0xff]
  %v973 = vld [vmem:[#allocation2 + $0xc] sm:$0xff]
  %v974 = vld [vmem:[#allocation2 + $0x1c] sm:$0xff]
  %v975 = vld [vmem:[#allocation2 + $0x24] sm:$0xff]
  %v976 = vld [vmem:[#allocation2 + $0x34] sm:$0xff]
  %v977 = vld [vmem:[#allocation2 + $0x3c] sm:$0xff]
  %v978 = vld [vmem:[#allocation2 + $0x4c] sm:$0xff]
  %v979 = vld [vmem:[#allocation2 + $0x54] sm:$0xff]
  %v980 = vld [vmem:[#allocation2 + $0x64] sm:$0xff]
  %v981 = vld [vmem:[#allocation2 + $0x6c] sm:$0xff]
  %v982 = vld [vmem:[#allocation2 + $0x7c] sm:$0xff]
  %v983 = vld [vmem:[#allocation2 + $0x84] sm:$0xff]
  %v984 = vld [vmem:[#allocation2 + $0x94] sm:$0xff]
  %v985 = vld [vmem:[#allocation2 + $0x9c] sm:$0xff]
  %v986 = vld [vmem:[#allocation2 + $0xac] sm:$0xff]
  %v987 = vld [vmem:[#allocation2 + $0xb4] sm:$0xff]
  %v988 = vld [vmem:[#allocation2 + $0xc4] sm:$0xff]
  %v989 = vld [vmem:[#allocation2 + $0xcc] sm:$0xff]
  %v990 = vld [vmem:[#allocation2 + $0xdc] sm:$0xff]
  %v991 = vld [vmem:[#allocation2 + $0xe4] sm:$0xff]
  %v992 = vld [vmem:[#allocation2 + $0xf4] sm:$0xff]
  %v993 = vld [vmem:[#allocation2 + $0xfc] sm:$0xff]
  %v994 = vld [vmem:[#allocation2 + $0x10c] sm:$0xff]
  %v995 = vld [vmem:[#allocation2 + $0x114] sm:$0xff]
  %v996 = vld [vmem:[#allocation2 + $0x124] sm:$0xff]
  %v997 = vld [vmem:[#allocation2 + $0x12c] sm:$0xff]
  %v998 = vld [vmem:[#allocation2 + $0x13c] sm:$0xff]
  %v999 = vld [vmem:[#allocation2 + $0x144] sm:$0xff]
  %v1000 = vld [vmem:[#allocation2 + $0x154] sm:$0xff]
  %v1001 = vld [vmem:[#allocation2 + $0x15c] sm:$0xff]
  %v1002 = vld [vmem:[#allocation2 + $0x16c] sm:$0xff]
  %v1003 = vld [vmem:[#allocation2 + $0x174] sm:$0xff]
  %v1004 = vld [vmem:[#allocation2 + $0x184] sm:$0xff]
  %v1005 = vld [vmem:[#allocation2 + $0x18c] sm:$0xff]
  %v1006 = vld [vmem:[#allocation2 + $0x19c] sm:$0xff]
  %v1007 = vld [vmem:[#allocation2 + $0x1a4] sm:$0xff]
  %v1008 = vld [vmem:[#allocation2 + $0x1b4] sm:$0xff]
  %v1009 = vld [vmem:[#allocation2 + $0x1bc] sm:$0xff]
  %v1010 = vld [vmem:[#allocation2 + $0x1cc] sm:$0xff]
  %v1011 = vld [vmem:[#allocation2 + $0x1d4] sm:$0xff]
  %v1012 = vld [vmem:[#allocation2 + $0x1e4] sm:$0xff]
  %v1013 = vld [vmem:[#allocation2 + $0x1ec] sm:$0xff]
  %v1014 = vld [vmem:[#allocation2 + $0x1fc] sm:$0xff]
  %v1015 = vld [vmem:[#allocation2 + $0x204] sm:$0xff]
  %v1016 = vld [vmem:[#allocation2 + $0x214] sm:$0xff]
  %v1017 = vld [vmem:[#allocation2 + $0x21c] sm:$0xff]
  %v1018 = vld [vmem:[#allocation2 + $0x22c] sm:$0xff]
  %v1019 = vld [vmem:[#allocation2 + $0x234] sm:$0xff]
  %v1020 = vmul.f32 %v972, 0.054488685
  %v1021 = vmul.f32 %v973, 0.054488685
  %v1022 = vmul.f32 %v974, 0.054488685
  %v1023 = vmul.f32 %v975, 0.054488685
  %v1024 = vmul.f32 %v976, 0.054488685
  %v1025 = vmul.f32 %v977, 0.054488685
  %v1026 = vmul.f32 %v978, 0.054488685
  %v1027 = vmul.f32 %v979, 0.054488685
  %v1028 = vmul.f32 %v980, 0.054488685
  %v1029 = vmul.f32 %v981, 0.054488685
  %v1030 = vmul.f32 %v982, 0.054488685
  %v1031 = vmul.f32 %v983, 0.054488685
  %v1032 = vmul.f32 %v984, 0.054488685
  %v1033 = vmul.f32 %v985, 0.054488685
  %v1034 = vmul.f32 %v986, 0.054488685
  %v1035 = vmul.f32 %v987, 0.054488685
  %v1036 = vmul.f32 %v988, 0.054488685
  %v1037 = vmul.f32 %v989, 0.054488685
  %v1038 = vmul.f32 %v990, 0.054488685
  %v1039 = vmul.f32 %v991, 0.054488685
  %v1040 = vmul.f32 %v992, 0.054488685
  %v1041 = vmul.f32 %v993, 0.054488685
  %v1042 = vmul.f32 %v994, 0.054488685
  %v1043 = vmul.f32 %v995, 0.054488685
  %v1044 = vmul.f32 %v996, 0.054488685
  %v1045 = vmul.f32 %v997, 0.054488685
  %v1046 = vmul.f32 %v998, 0.054488685
  %v1047 = vmul.f32 %v999, 0.054488685
  %v1048 = vmul.f32 %v1000, 0.054488685
  %v1049 = vmul.f32 %v1001, 0.054488685
  %v1050 = vmul.f32 %v1002, 0.054488685
  %v1051 = vmul.f32 %v1003, 0.054488685
  %v1052 = vmul.f32 %v1004, 0.054488685
  %v1053 = vmul.f32 %v1005, 0.054488685
  %v1054 = vmul.f32 %v1006, 0.054488685
  %v1055 = vmul.f32 %v1007, 0.054488685
  %v1056 = vmul.f32 %v1008, 0.054488685
  %v1057 = vmul.f32 %v1009, 0.054488685
  %v1058 = vmul.f32 %v1010, 0.054488685
  %v1059 = vmul.f32 %v1011, 0.054488685
  %v1060 = vmul.f32 %v1012, 0.054488685
  %v1061 = vmul.f32 %v1013, 0.054488685
  %v1062 = vmul.f32 %v1014, 0.054488685
  %v1063 = vmul.f32 %v1015, 0.054488685
  %v1064 = vmul.f32 %v1016, 0.054488685
  %v1065 = vmul.f32 %v1017, 0.054488685
  %v1066 = vmul.f32 %v1018, 0.054488685
  %v1067 = vmul.f32 %v1019, 0.054488685
  %v1068 = vadd.f32 %v924, %v1020
  %v1069 = vadd.f32 %v925, %v1021
  %v1070 = vadd.f32 %v926, %v1022
  %v1071 = vadd.f32 %v927, %v1023
  %v1072 = vadd.f32 %v928, %v1024
  %v1073 = vadd.f32 %v929, %v1025
  %v1074 = vadd.f32 %v930, %v1026
  %v1075 = vadd.f32 %v931, %v1027
  %v1076 = vadd.f32 %v932, %v1028
  %v1077 = vadd.f32 %v933, %v1029
  %v1078 = vadd.f32 %v934, %v1030
  %v1079 = vadd.f32 %v935, %v1031
  %v1080 = vadd.f32 %v936, %v1032
  %v1081 = vadd.f32 %v937, %v1033
  %v1082 = vadd.f32 %v938, %v1034
  %v1083 = vadd.f32 %v939, %v1035
  %v1084 = vadd.f32 %v940, %v1036
  %v1085 = vadd.f32 %v941, %v1037
  %v1086 = vadd.f32 %v942, %v1038
  %v1087 = vadd.f32 %v943, %v1039
  %v1088 = vadd.f32 %v944, %v1040
  %v1089 = vadd.f32 %v945, %v1041
  %v1090 = vadd.f32 %v946, %v1042
  %v1091 = vadd.f32 %v947, %v1043
  %v1092 = vadd.f32 %v948, %v1044
  %v1093 = vadd.f32 %v949, %v1045
  %v1094 = vadd.f32 %v950, %v1046
  %v1095 = vadd.f32 %v951, %v1047
  %v1096 = vadd.f32 %v952, %v1048
  %v1097 = vadd.f32 %v953, %v1049
  %v1098 = vadd.f32 %v954, %v1050
  %v1099 = vadd.f32 %v955, %v1051
  %v1100 = vadd.f32 %v956, %v1052
  %v1101 = vadd.f32 %v957, %v1053
  %v1102 = vadd.f32 %v958, %v1054
  %v1103 = vadd.f32 %v959, %v1055
  %v1104 = vadd.f32 %v960, %v1056
  %v1105 = vadd.f32 %v961, %v1057
  %v1106 = vadd.f32 %v962, %v1058
  %v1107 = vadd.f32 %v963, %v1059
  %v1108 = vadd.f32 %v964, %v1060
  %v1109 = vadd.f32 %v965, %v1061
  %v1110 = vadd.f32 %v966, %v1062
  %v1111 = vadd.f32 %v967, %v1063
  %v1112 = vadd.f32 %v968, %v1064
  %v1113 = vadd.f32 %v969, %v1065
  %v1114 = vadd.f32 %v970, %v1066
  %v1115 = vadd.f32 %v971, %v1067
  %v1116 = vmul.f32 %v1068, 0.054488685
  %v1117 = vmul.f32 %v1069, 0.054488685
  %v1118 = vmul.f32 %v1070, 0.054488685
  %v1119 = vmul.f32 %v1071, 0.054488685
  %v1120 = vmul.f32 %v1072, 0.054488685
  %v1121 = vmul.f32 %v1073, 0.054488685
  %v1122 = vmul.f32 %v1074, 0.054488685
  %v1123 = vmul.f32 %v1075, 0.054488685
  %v1124 = vmul.f32 %v1076, 0.054488685
  %v1125 = vmul.f32 %v1077, 0.054488685
  %v1126 = vmul.f32 %v1078, 0.054488685
  %v1127 = vmul.f32 %v1079, 0.054488685
  %v1128 = vmul.f32 %v1080, 0.054488685
  %v1129 = vmul.f32 %v1081, 0.054488685
  %v1130 = vmul.f32 %v1082, 0.054488685
  %v1131 = vmul.f32 %v1083, 0.054488685
  %v1132 = vmul.f32 %v1084, 0.054488685
  %v1133 = vmul.f32 %v1085, 0.054488685
  %v1134 = vmul.f32 %v1086, 0.054488685
  %v1135 = vmul.f32 %v1087, 0.054488685
  %v1136 = vmul.f32 %v1088, 0.054488685
  %v1137 = vmul.f32 %v1089, 0.054488685
  %v1138 = vmul.f32 %v1090, 0.054488685
  %v1139 = vmul.f32 %v1091, 0.054488685
  %v1140 = vmul.f32 %v1092, 0.054488685
  %v1141 = vmul.f32 %v1093, 0.054488685
  %v1142 = vmul.f32 %v1094, 0.054488685
  %v1143 = vmul.f32 %v1095, 0.054488685
  %v1144 = vmul.f32 %v1096, 0.054488685
  %v1145 = vmul.f32 %v1097, 0.054488685
  %v1146 = vmul.f32 %v1098, 0.054488685
  %v1147 = vmul.f32 %v1099, 0.054488685
  %v1148 = vmul.f32 %v1100, 0.054488685
  %v1149 = vmul.f32 %v1101, 0.054488685
  %v1150 = vmul.f32 %v1102, 0.054488685
  %v1151 = vmul.f32 %v1103, 0.054488685
  %v1152 = vmul.f32 %v1104, 0.054488685
  %v1153 = vmul.f32 %v1105, 0.054488685
  %v1154 = vmul.f32 %v1106, 0.054488685
  %v1155 = vmul.f32 %v1107, 0.054488685
  %v1156 = vmul.f32 %v1108, 0.054488685
  %v1157 = vmul.f32 %v1109, 0.054488685
  %v1158 = vmul.f32 %v1110, 0.054488685
  %v1159 = vmul.f32 %v1111, 0.054488685
  %v1160 = vmul.f32 %v1112, 0.054488685
  %v1161 = vmul.f32 %v1113, 0.054488685
  %v1162 = vmul.f32 %v1114, 0.054488685
  %v1163 = vmul.f32 %v1115, 0.054488685
  %v1164 = vmul.f32 %v1068, 0.24420135
  %v1165 = vmul.f32 %v1069, 0.24420135
  %v1166 = vmul.f32 %v1070, 0.24420135
  %v1167 = vmul.f32 %v1071, 0.24420135
  %v1168 = vmul.f32 %v1072, 0.24420135
  %v1169 = vmul.f32 %v1073, 0.24420135
  %v1170 = vmul.f32 %v1074, 0.24420135
  %v1171 = vmul.f32 %v1075, 0.24420135
  %v1172 = vmul.f32 %v1076, 0.24420135
  %v1173 = vmul.f32 %v1077, 0.24420135
  %v1174 = vmul.f32 %v1078, 0.24420135
  %v1175 = vmul.f32 %v1079, 0.24420135
  %v1176 = vmul.f32 %v1080, 0.24420135
  %v1177 = vmul.f32 %v1081, 0.24420135
  %v1178 = vmul.f32 %v1082, 0.24420135
  %v1179 = vmul.f32 %v1083, 0.24420135
  %v1180 = vmul.f32 %v1084, 0.24420135
  %v1181 = vmul.f32 %v1085, 0.24420135
  %v1182 = vmul.f32 %v1086, 0.24420135
  %v1183 = vmul.f32 %v1087, 0.24420135
  %v1184 = vmul.f32 %v1088, 0.24420135
  %v1185 = vmul.f32 %v1089, 0.24420135
  %v1186 = vmul.f32 %v1090, 0.24420135
  %v1187 = vmul.f32 %v1091, 0.24420135
  %v1188 = vmul.f32 %v1092, 0.24420135
  %v1189 = vmul.f32 %v1093, 0.24420135
  %v1190 = vmul.f32 %v1094, 0.24420135
  %v1191 = vmul.f32 %v1095, 0.24420135
  %v1192 = vmul.f32 %v1096, 0.24420135
  %v1193 = vmul.f32 %v1097, 0.24420135
  %v1194 = vmul.f32 %v1098, 0.24420135
  %v1195 = vmul.f32 %v1099, 0.24420135
  %v1196 = vmul.f32 %v1100, 0.24420135
  %v1197 = vmul.f32 %v1101, 0.24420135
  %v1198 = vmul.f32 %v1102, 0.24420135
  %v1199 = vmul.f32 %v1103, 0.24420135
  %v1200 = vmul.f32 %v1104, 0.24420135
  %v1201 = vmul.f32 %v1105, 0.24420135
  %v1202 = vmul.f32 %v1106, 0.24420135
  %v1203 = vmul.f32 %v1107, 0.24420135
  %v1204 = vmul.f32 %v1108, 0.24420135
  %v1205 = vmul.f32 %v1109, 0.24420135
  %v1206 = vmul.f32 %v1110, 0.24420135
  %v1207 = vmul.f32 %v1111, 0.24420135
  %v1208 = vmul.f32 %v1112, 0.24420135
  %v1209 = vmul.f32 %v1113, 0.24420135
  %v1210 = vmul.f32 %v1114, 0.24420135
  %v1211 = vmul.f32 %v1115, 0.24420135
  %1260 = vrot.lane.b32.xlu0 %v1164, 127
  %v1261 = vpop.permute.xlu0 %1260
  %1262 = vrot.lane.b32.xlu0 %v1165, 127
  %v1263 = vpop.permute.xlu0 %1262
  %1264 = vrot.lane.b32.xlu0 %v1166, 127
  %v1265 = vpop.permute.xlu0 %1264
  %1266 = vrot.lane.b32.xlu0 %v1167, 127
  %v1267 = vpop.permute.xlu0 %1266
  %1268 = vrot.lane.b32.xlu0 %v1168, 127
  %v1269 = vpop.permute.xlu0 %1268
  %1270 = vrot.lane.b32.xlu0 %v1169, 127
  %v1271 = vpop.permute.xlu0 %1270
  %1272 = vrot.lane.b32.xlu0 %v1170, 127
  %v1273 = vpop.permute.xlu0 %1272
  %1274 = vrot.lane.b32.xlu0 %v1171, 127
  %v1275 = vpop.permute.xlu0 %1274
  %1276 = vrot.lane.b32.xlu0 %v1172, 127
  %v1277 = vpop.permute.xlu0 %1276
  %1278 = vrot.lane.b32.xlu0 %v1173, 127
  %v1279 = vpop.permute.xlu0 %1278
  %1280 = vrot.lane.b32.xlu0 %v1174, 127
  %v1281 = vpop.permute.xlu0 %1280
  %1282 = vrot.lane.b32.xlu0 %v1175, 127
  %v1283 = vpop.permute.xlu0 %1282
  %1284 = vrot.lane.b32.xlu0 %v1176, 127
  %v1285 = vpop.permute.xlu0 %1284
  %1286 = vrot.lane.b32.xlu0 %v1177, 127
  %v1287 = vpop.permute.xlu0 %1286
  %1288 = vrot.lane.b32.xlu0 %v1178, 127
  %v1289 = vpop.permute.xlu0 %1288
  %1290 = vrot.lane.b32.xlu0 %v1179, 127
  %v1291 = vpop.permute.xlu0 %1290
  %1292 = vrot.lane.b32.xlu0 %v1180, 127
  %v1293 = vpop.permute.xlu0 %1292
  %1294 = vrot.lane.b32.xlu0 %v1181, 127
  %v1295 = vpop.permute.xlu0 %1294
  %1296 = vrot.lane.b32.xlu0 %v1182, 127
  %v1297 = vpop.permute.xlu0 %1296
  %1298 = vrot.lane.b32.xlu0 %v1183, 127
  %v1299 = vpop.permute.xlu0 %1298
  %1300 = vrot.lane.b32.xlu0 %v1184, 127
  %v1301 = vpop.permute.xlu0 %1300
  %1302 = vrot.lane.b32.xlu0 %v1185, 127
  %v1303 = vpop.permute.xlu0 %1302
  %1304 = vrot.lane.b32.xlu0 %v1186, 127
  %v1305 = vpop.permute.xlu0 %1304
  %1306 = vrot.lane.b32.xlu0 %v1187, 127
  %v1307 = vpop.permute.xlu0 %1306
  %1308 = vrot.lane.b32.xlu0 %v1188, 127
  %v1309 = vpop.permute.xlu0 %1308
  %1310 = vrot.lane.b32.xlu0 %v1189, 127
  %v1311 = vpop.permute.xlu0 %1310
  %1312 = vrot.lane.b32.xlu0 %v1190, 127
  %v1313 = vpop.permute.xlu0 %1312
  %1314 = vrot.lane.b32.xlu0 %v1191, 127
  %v1315 = vpop.permute.xlu0 %1314
  %1316 = vrot.lane.b32.xlu0 %v1192, 127
  %v1317 = vpop.permute.xlu0 %1316
  %1318 = vrot.lane.b32.xlu0 %v1193, 127
  %v1319 = vpop.permute.xlu0 %1318
  %1320 = vrot.lane.b32.xlu0 %v1194, 127
  %v1321 = vpop.permute.xlu0 %1320
  %1322 = vrot.lane.b32.xlu0 %v1195, 127
  %v1323 = vpop.permute.xlu0 %1322
  %1324 = vrot.lane.b32.xlu0 %v1196, 127
  %v1325 = vpop.permute.xlu0 %1324
  %1326 = vrot.lane.b32.xlu0 %v1197, 127
  %v1327 = vpop.permute.xlu0 %1326
  %1328 = vrot.lane.b32.xlu0 %v1198, 127
  %v1329 = vpop.permute.xlu0 %1328
  %1330 = vrot.lane.b32.xlu0 %v1199, 127
  %v1331 = vpop.permute.xlu0 %1330
  %1332 = vrot.lane.b32.xlu0 %v1200, 127
  %v1333 = vpop.permute.xlu0 %1332
  %1334 = vrot.lane.b32.xlu0 %v1201, 127
  %v1335 = vpop.permute.xlu0 %1334
  %1336 = vrot.lane.b32.xlu0 %v1202, 127
  %v1337 = vpop.permute.xlu0 %1336
  %1338 = vrot.lane.b32.xlu0 %v1203, 127
  %v1339 = vpop.permute.xlu0 %1338
  %1340 = vrot.lane.b32.xlu0 %v1204, 127
  %v1341 = vpop.permute.xlu0 %1340
  %1342 = vrot.lane.b32.xlu0 %v1205, 127
  %v1343 = vpop.permute.xlu0 %1342
  %1344 = vrot.lane.b32.xlu0 %v1206, 127
  %v1345 = vpop.permute.xlu0 %1344
  %1346 = vrot.lane.b32.xlu0 %v1207, 127
  %v1347 = vpop.permute.xlu0 %1346
  %1348 = vrot.lane.b32.xlu0 %v1208, 127
  %v1349 = vpop.permute.xlu0 %1348
  %1350 = vrot.lane.b32.xlu0 %v1209, 127
  %v1351 = vpop.permute.xlu0 %1350
  %1352 = vrot.lane.b32.xlu0 %v1210, 127
  %v1353 = vpop.permute.xlu0 %1352
  %1354 = vrot.lane.b32.xlu0 %v1211, 127
  %v1355 = vpop.permute.xlu0 %1354
  %v1404 = vadd.f32 %v1116, %v1261
  %v1405 = vadd.f32 %v1117, %v1263
  %v1406 = vadd.f32 %v1118, %v1265
  %v1407 = vadd.f32 %v1119, %v1267
  %v1408 = vadd.f32 %v1120, %v1269
  %v1409 = vadd.f32 %v1121, %v1271
  %v1410 = vadd.f32 %v1122, %v1273
  %v1411 = vadd.f32 %v1123, %v1275
  %v1412 = vadd.f32 %v1124, %v1277
  %v1413 = vadd.f32 %v1125, %v1279
  %v1414 = vadd.f32 %v1126, %v1281
  %v1415 = vadd.f32 %v1127, %v1283
  %v1416 = vadd.f32 %v1128, %v1285
  %v1417 = vadd.f32 %v1129, %v1287
  %v1418 = vadd.f32 %v1130, %v1289
  %v1419 = vadd.f32 %v1131, %v1291
  %v1420 = vadd.f32 %v1132, %v1293
  %v1421 = vadd.f32 %v1133, %v1295
  %v1422 = vadd.f32 %v1134, %v1297
  %v1423 = vadd.f32 %v1135, %v1299
  %v1424 = vadd.f32 %v1136, %v1301
  %v1425 = vadd.f32 %v1137, %v1303
  %v1426 = vadd.f32 %v1138, %v1305
  %v1427 = vadd.f32 %v1139, %v1307
  %v1428 = vadd.f32 %v1140, %v1309
  %v1429 = vadd.f32 %v1141, %v1311
  %v1430 = vadd.f32 %v1142, %v1313
  %v1431 = vadd.f32 %v1143, %v1315
  %v1432 = vadd.f32 %v1144, %v1317
  %v1433 = vadd.f32 %v1145, %v1319
  %v1434 = vadd.f32 %v1146, %v1321
  %v1435 = vadd.f32 %v1147, %v1323
  %v1436 = vadd.f32 %v1148, %v1325
  %v1437 = vadd.f32 %v1149, %v1327
  %v1438 = vadd.f32 %v1150, %v1329
  %v1439 = vadd.f32 %v1151, %v1331
  %v1440 = vadd.f32 %v1152, %v1333
  %v1441 = vadd.f32 %v1153, %v1335
  %v1442 = vadd.f32 %v1154, %v1337
  %v1443 = vadd.f32 %v1155, %v1339
  %v1444 = vadd.f32 %v1156, %v1341
  %v1445 = vadd.f32 %v1157, %v1343
  %v1446 = vadd.f32 %v1158, %v1345
  %v1447 = vadd.f32 %v1159, %v1347
  %v1448 = vadd.f32 %v1160, %v1349
  %v1449 = vadd.f32 %v1161, %v1351
  %v1450 = vadd.f32 %v1162, %v1353
  %v1451 = vadd.f32 %v1163, %v1355
  %v1452 = vmul.f32 %v1068, 0.40261996
  %v1453 = vmul.f32 %v1069, 0.40261996
  %v1454 = vmul.f32 %v1070, 0.40261996
  %v1455 = vmul.f32 %v1071, 0.40261996
  %v1456 = vmul.f32 %v1072, 0.40261996
  %v1457 = vmul.f32 %v1073, 0.40261996
  %v1458 = vmul.f32 %v1074, 0.40261996
  %v1459 = vmul.f32 %v1075, 0.40261996
  %v1460 = vmul.f32 %v1076, 0.40261996
  %v1461 = vmul.f32 %v1077, 0.40261996
  %v1462 = vmul.f32 %v1078, 0.40261996
  %v1463 = vmul.f32 %v1079, 0.40261996
  %v1464 = vmul.f32 %v1080, 0.40261996
  %v1465 = vmul.f32 %v1081, 0.40261996
  %v1466 = vmul.f32 %v1082, 0.40261996
  %v1467 = vmul.f32 %v1083, 0.40261996
  %v1468 = vmul.f32 %v1084, 0.40261996
  %v1469 = vmul.f32 %v1085, 0.40261996
  %v1470 = vmul.f32 %v1086, 0.40261996
  %v1471 = vmul.f32 %v1087, 0.40261996
  %v1472 = vmul.f32 %v1088, 0.40261996
  %v1473 = vmul.f32 %v1089, 0.40261996
  %v1474 = vmul.f32 %v1090, 0.40261996
  %v1475 = vmul.f32 %v1091, 0.40261996
  %v1476 = vmul.f32 %v1092, 0.40261996
  %v1477 = vmul.f32 %v1093, 0.40261996
  %v1478 = vmul.f32 %v1094, 0.40261996
  %v1479 = vmul.f32 %v1095, 0.40261996
  %v1480 = vmul.f32 %v1096, 0.40261996
  %v1481 = vmul.f32 %v1097, 0.40261996
  %v1482 = vmul.f32 %v1098, 0.40261996
  %v1483 = vmul.f32 %v1099, 0.40261996
  %v1484 = vmul.f32 %v1100, 0.40261996
  %v1485 = vmul.f32 %v1101, 0.40261996
  %v1486 = vmul.f32 %v1102, 0.40261996
  %v1487 = vmul.f32 %v1103, 0.40261996
  %v1488 = vmul.f32 %v1104, 0.40261996
  %v1489 = vmul.f32 %v1105, 0.40261996
  %v1490 = vmul.f32 %v1106, 0.40261996
  %v1491 = vmul.f32 %v1107, 0.40261996
  %v1492 = vmul.f32 %v1108, 0.40261996
  %v1493 = vmul.f32 %v1109, 0.40261996
  %v1494 = vmul.f32 %v1110, 0.40261996
  %v1495 = vmul.f32 %v1111, 0.40261996
  %v1496 = vmul.f32 %v1112, 0.40261996
  %v1497 = vmul.f32 %v1113, 0.40261996
  %v1498 = vmul.f32 %v1114, 0.40261996
  %v1499 = vmul.f32 %v1115, 0.40261996
  %1548 = vrot.lane.b32.xlu0 %v1452, 126
  %v1549 = vpop.permute.xlu0 %1548
  %1550 = vrot.lane.b32.xlu0 %v1453, 126
  %v1551 = vpop.permute.xlu0 %1550
  %1552 = vrot.lane.b32.xlu0 %v1454, 126
  %v1553 = vpop.permute.xlu0 %1552
  %1554 = vrot.lane.b32.xlu0 %v1455, 126
  %v1555 = vpop.permute.xlu0 %1554
  %1556 = vrot.lane.b32.xlu0 %v1456, 126
  %v1557 = vpop.permute.xlu0 %1556
  %1558 = vrot.lane.b32.xlu0 %v1457, 126
  %v1559 = vpop.permute.xlu0 %1558
  %1560 = vrot.lane.b32.xlu0 %v1458, 126
  %v1561 = vpop.permute.xlu0 %1560
  %1562 = vrot.lane.b32.xlu0 %v1459, 126
  %v1563 = vpop.permute.xlu0 %1562
  %1564 = vrot.lane.b32.xlu0 %v1460, 126
  %v1565 = vpop.permute.xlu0 %1564
  %1566 = vrot.lane.b32.xlu0 %v1461, 126
  %v1567 = vpop.permute.xlu0 %1566
  %1568 = vrot.lane.b32.xlu0 %v1462, 126
  %v1569 = vpop.permute.xlu0 %1568
  %1570 = vrot.lane.b32.xlu0 %v1463, 126
  %v1571 = vpop.permute.xlu0 %1570
  %1572 = vrot.lane.b32.xlu0 %v1464, 126
  %v1573 = vpop.permute.xlu0 %1572
  %1574 = vrot.lane.b32.xlu0 %v1465, 126
  %v1575 = vpop.permute.xlu0 %1574
  %1576 = vrot.lane.b32.xlu0 %v1466, 126
  %v1577 = vpop.permute.xlu0 %1576
  %1578 = vrot.lane.b32.xlu0 %v1467, 126
  %v1579 = vpop.permute.xlu0 %1578
  %1580 = vrot.lane.b32.xlu0 %v1468, 126
  %v1581 = vpop.permute.xlu0 %1580
  %1582 = vrot.lane.b32.xlu0 %v1469, 126
  %v1583 = vpop.permute.xlu0 %1582
  %1584 = vrot.lane.b32.xlu0 %v1470, 126
  %v1585 = vpop.permute.xlu0 %1584
  %1586 = vrot.lane.b32.xlu0 %v1471, 126
  %v1587 = vpop.permute.xlu0 %1586
  %1588 = vrot.lane.b32.xlu0 %v1472, 126
  %v1589 = vpop.permute.xlu0 %1588
  %1590 = vrot.lane.b32.xlu0 %v1473, 126
  %v1591 = vpop.permute.xlu0 %1590
  %1592 = vrot.lane.b32.xlu0 %v1474, 126
  %v1593 = vpop.permute.xlu0 %1592
  %1594 = vrot.lane.b32.xlu0 %v1475, 126
  %v1595 = vpop.permute.xlu0 %1594
  %1596 = vrot.lane.b32.xlu0 %v1476, 126
  %v1597 = vpop.permute.xlu0 %1596
  %1598 = vrot.lane.b32.xlu0 %v1477, 126
  %v1599 = vpop.permute.xlu0 %1598
  %1600 = vrot.lane.b32.xlu0 %v1478, 126
  %v1601 = vpop.permute.xlu0 %1600
  %1602 = vrot.lane.b32.xlu0 %v1479, 126
  %v1603 = vpop.permute.xlu0 %1602
  %1604 = vrot.lane.b32.xlu0 %v1480, 126
  %v1605 = vpop.permute.xlu0 %1604
  %1606 = vrot.lane.b32.xlu0 %v1481, 126
  %v1607 = vpop.permute.xlu0 %1606
  %1608 = vrot.lane.b32.xlu0 %v1482, 126
  %v1609 = vpop.permute.xlu0 %1608
  %1610 = vrot.lane.b32.xlu0 %v1483, 126
  %v1611 = vpop.permute.xlu0 %1610
  %1612 = vrot.lane.b32.xlu0 %v1484, 126
  %v1613 = vpop.permute.xlu0 %1612
  %1614 = vrot.lane.b32.xlu0 %v1485, 126
  %v1615 = vpop.permute.xlu0 %1614
  %1616 = vrot.lane.b32.xlu0 %v1486, 126
  %v1617 = vpop.permute.xlu0 %1616
  %1618 = vrot.lane.b32.xlu0 %v1487, 126
  %v1619 = vpop.permute.xlu0 %1618
  %1620 = vrot.lane.b32.xlu0 %v1488, 126
  %v1621 = vpop.permute.xlu0 %1620
  %1622 = vrot.lane.b32.xlu0 %v1489, 126
  %v1623 = vpop.permute.xlu0 %1622
  %1624 = vrot.lane.b32.xlu0 %v1490, 126
  %v1625 = vpop.permute.xlu0 %1624
  %1626 = vrot.lane.b32.xlu0 %v1491, 126
  %v1627 = vpop.permute.xlu0 %1626
  %1628 = vrot.lane.b32.xlu0 %v1492, 126
  %v1629 = vpop.permute.xlu0 %1628
  %1630 = vrot.lane.b32.xlu0 %v1493, 126
  %v1631 = vpop.permute.xlu0 %1630
  %1632 = vrot.lane.b32.xlu0 %v1494, 126
  %v1633 = vpop.permute.xlu0 %1632
  %1634 = vrot.lane.b32.xlu0 %v1495, 126
  %v1635 = vpop.permute.xlu0 %1634
  %1636 = vrot.lane.b32.xlu0 %v1496, 126
  %v1637 = vpop.permute.xlu0 %1636
  %1638 = vrot.lane.b32.xlu0 %v1497, 126
  %v1639 = vpop.permute.xlu0 %1638
  %1640 = vrot.lane.b32.xlu0 %v1498, 126
  %v1641 = vpop.permute.xlu0 %1640
  %1642 = vrot.lane.b32.xlu0 %v1499, 126
  %v1643 = vpop.permute.xlu0 %1642
  %v1692 = vadd.f32 %v1404, %v1549
  %v1693 = vadd.f32 %v1405, %v1551
  %v1694 = vadd.f32 %v1406, %v1553
  %v1695 = vadd.f32 %v1407, %v1555
  %v1696 = vadd.f32 %v1408, %v1557
  %v1697 = vadd.f32 %v1409, %v1559
  %v1698 = vadd.f32 %v1410, %v1561
  %v1699 = vadd.f32 %v1411, %v1563
  %v1700 = vadd.f32 %v1412, %v1565
  %v1701 = vadd.f32 %v1413, %v1567
  %v1702 = vadd.f32 %v1414, %v1569
  %v1703 = vadd.f32 %v1415, %v1571
  %v1704 = vadd.f32 %v1416, %v1573
  %v1705 = vadd.f32 %v1417, %v1575
  %v1706 = vadd.f32 %v1418, %v1577
  %v1707 = vadd.f32 %v1419, %v1579
  %v1708 = vadd.f32 %v1420, %v1581
  %v1709 = vadd.f32 %v1421, %v1583
  %v1710 = vadd.f32 %v1422, %v1585
  %v1711 = vadd.f32 %v1423, %v1587
  %v1712 = vadd.f32 %v1424, %v1589
  %v1713 = vadd.f32 %v1425, %v1591
  %v1714 = vadd.f32 %v1426, %v1593
  %v1715 = vadd.f32 %v1427, %v1595
  %v1716 = vadd.f32 %v1428, %v1597
  %v1717 = vadd.f32 %v1429, %v1599
  %v1718 = vadd.f32 %v1430, %v1601
  %v1719 = vadd.f32 %v1431, %v1603
  %v1720 = vadd.f32 %v1432, %v1605
  %v1721 = vadd.f32 %v1433, %v1607
  %v1722 = vadd.f32 %v1434, %v1609
  %v1723 = vadd.f32 %v1435, %v1611
  %v1724 = vadd.f32 %v1436, %v1613
  %v1725 = vadd.f32 %v1437, %v1615
  %v1726 = vadd.f32 %v1438, %v1617
  %v1727 = vadd.f32 %v1439, %v1619
  %v1728 = vadd.f32 %v1440, %v1621
  %v1729 = vadd.f32 %v1441, %v1623
  %v1730 = vadd.f32 %v1442, %v1625
  %v1731 = vadd.f32 %v1443, %v1627
  %v1732 = vadd.f32 %v1444, %v1629
  %v1733 = vadd.f32 %v1445, %v1631
  %v1734 = vadd.f32 %v1446, %v1633
  %v1735 = vadd.f32 %v1447, %v1635
  %v1736 = vadd.f32 %v1448, %v1637
  %v1737 = vadd.f32 %v1449, %v1639
  %v1738 = vadd.f32 %v1450, %v1641
  %v1739 = vadd.f32 %v1451, %v1643
  %1740 = vrot.lane.b32.xlu0 %v1164, 125
  %v1741 = vpop.permute.xlu0 %1740
  %1742 = vrot.lane.b32.xlu0 %v1165, 125
  %v1743 = vpop.permute.xlu0 %1742
  %1744 = vrot.lane.b32.xlu0 %v1166, 125
  %v1745 = vpop.permute.xlu0 %1744
  %1746 = vrot.lane.b32.xlu0 %v1167, 125
  %v1747 = vpop.permute.xlu0 %1746
  %1748 = vrot.lane.b32.xlu0 %v1168, 125
  %v1749 = vpop.permute.xlu0 %1748
  %1750 = vrot.lane.b32.xlu0 %v1169, 125
  %v1751 = vpop.permute.xlu0 %1750
  %1752 = vrot.lane.b32.xlu0 %v1170, 125
  %v1753 = vpop.permute.xlu0 %1752
  %1754 = vrot.lane.b32.xlu0 %v1171, 125
  %v1755 = vpop.permute.xlu0 %1754
  %1756 = vrot.lane.b32.xlu0 %v1172, 125
  %v1757 = vpop.permute.xlu0 %1756
  %1758 = vrot.lane.b32.xlu0 %v1173, 125
  %v1759 = vpop.permute.xlu0 %1758
  %1760 = vrot.lane.b32.xlu0 %v1174, 125
  %v1761 = vpop.permute.xlu0 %1760
  %1762 = vrot.lane.b32.xlu0 %v1175, 125
  %v1763 = vpop.permute.xlu0 %1762
  %1764 = vrot.lane.b32.xlu0 %v1176, 125
  %v1765 = vpop.permute.xlu0 %1764
  %1766 = vrot.lane.b32.xlu0 %v1177, 125
  %v1767 = vpop.permute.xlu0 %1766
  %1768 = vrot.lane.b32.xlu0 %v1178, 125
  %v1769 = vpop.permute.xlu0 %1768
  %1770 = vrot.lane.b32.xlu0 %v1179, 125
  %v1771 = vpop.permute.xlu0 %1770
  %1772 = vrot.lane.b32.xlu0 %v1180, 125
  %v1773 = vpop.permute.xlu0 %1772
  %1774 = vrot.lane.b32.xlu0 %v1181, 125
  %v1775 = vpop.permute.xlu0 %1774
  %1776 = vrot.lane.b32.xlu0 %v1182, 125
  %v1777 = vpop.permute.xlu0 %1776
  %1778 = vrot.lane.b32.xlu0 %v1183, 125
  %v1779 = vpop.permute.xlu0 %1778
  %1780 = vrot.lane.b32.xlu0 %v1184, 125
  %v1781 = vpop.permute.xlu0 %1780
  %1782 = vrot.lane.b32.xlu0 %v1185, 125
  %v1783 = vpop.permute.xlu0 %1782
  %1784 = vrot.lane.b32.xlu0 %v1186, 125
  %v1785 = vpop.permute.xlu0 %1784
  %1786 = vrot.lane.b32.xlu0 %v1187, 125
  %v1787 = vpop.permute.xlu0 %1786
  %1788 = vrot.lane.b32.xlu0 %v1188, 125
  %v1789 = vpop.permute.xlu0 %1788
  %1790 = vrot.lane.b32.xlu0 %v1189, 125
  %v1791 = vpop.permute.xlu0 %1790
  %1792 = vrot.lane.b32.xlu0 %v1190, 125
  %v1793 = vpop.permute.xlu0 %1792
  %1794 = vrot.lane.b32.xlu0 %v1191, 125
  %v1795 = vpop.permute.xlu0 %1794
  %1796 = vrot.lane.b32.xlu0 %v1192, 125
  %v1797 = vpop.permute.xlu0 %1796
  %1798 = vrot.lane.b32.xlu0 %v1193, 125
  %v1799 = vpop.permute.xlu0 %1798
  %1800 = vrot.lane.b32.xlu0 %v1194, 125
  %v1801 = vpop.permute.xlu0 %1800
  %1802 = vrot.lane.b32.xlu0 %v1195, 125
  %v1803 = vpop.permute.xlu0 %1802
  %1804 = vrot.lane.b32.xlu0 %v1196, 125
  %v1805 = vpop.permute.xlu0 %1804
  %1806 = vrot.lane.b32.xlu0 %v1197, 125
  %v1807 = vpop.permute.xlu0 %1806
  %1808 = vrot.lane.b32.xlu0 %v1198, 125
  %v1809 = vpop.permute.xlu0 %1808
  %1810 = vrot.lane.b32.xlu0 %v1199, 125
  %v1811 = vpop.permute.xlu0 %1810
  %1812 = vrot.lane.b32.xlu0 %v1200, 125
  %v1813 = vpop.permute.xlu0 %1812
  %1814 = vrot.lane.b32.xlu0 %v1201, 125
  %v1815 = vpop.permute.xlu0 %1814
  %1816 = vrot.lane.b32.xlu0 %v1202, 125
  %v1817 = vpop.permute.xlu0 %1816
  %1818 = vrot.lane.b32.xlu0 %v1203, 125
  %v1819 = vpop.permute.xlu0 %1818
  %1820 = vrot.lane.b32.xlu0 %v1204, 125
  %v1821 = vpop.permute.xlu0 %1820
  %1822 = vrot.lane.b32.xlu0 %v1205, 125
  %v1823 = vpop.permute.xlu0 %1822
  %1824 = vrot.lane.b32.xlu0 %v1206, 125
  %v1825 = vpop.permute.xlu0 %1824
  %1826 = vrot.lane.b32.xlu0 %v1207, 125
  %v1827 = vpop.permute.xlu0 %1826
  %1828 = vrot.lane.b32.xlu0 %v1208, 125
  %v1829 = vpop.permute.xlu0 %1828
  %1830 = vrot.lane.b32.xlu0 %v1209, 125
  %v1831 = vpop.permute.xlu0 %1830
  %1832 = vrot.lane.b32.xlu0 %v1210, 125
  %v1833 = vpop.permute.xlu0 %1832
  %1834 = vrot.lane.b32.xlu0 %v1211, 125
  %v1835 = vpop.permute.xlu0 %1834
  %v1884 = vadd.f32 %v1692, %v1741
  %v1885 = vadd.f32 %v1693, %v1743
  %v1886 = vadd.f32 %v1694, %v1745
  %v1887 = vadd.f32 %v1695, %v1747
  %v1888 = vadd.f32 %v1696, %v1749
  %v1889 = vadd.f32 %v1697, %v1751
  %v1890 = vadd.f32 %v1698, %v1753
  %v1891 = vadd.f32 %v1699, %v1755
  %v1892 = vadd.f32 %v1700, %v1757
  %v1893 = vadd.f32 %v1701, %v1759
  %v1894 = vadd.f32 %v1702, %v1761
  %v1895 = vadd.f32 %v1703, %v1763
  %v1896 = vadd.f32 %v1704, %v1765
  %v1897 = vadd.f32 %v1705, %v1767
  %v1898 = vadd.f32 %v1706, %v1769
  %v1899 = vadd.f32 %v1707, %v1771
  %v1900 = vadd.f32 %v1708, %v1773
  %v1901 = vadd.f32 %v1709, %v1775
  %v1902 = vadd.f32 %v1710, %v1777
  %v1903 = vadd.f32 %v1711, %v1779
  %v1904 = vadd.f32 %v1712, %v1781
  %v1905 = vadd.f32 %v1713, %v1783
  %v1906 = vadd.f32 %v1714, %v1785
  %v1907 = vadd.f32 %v1715, %v1787
  %v1908 = vadd.f32 %v1716, %v1789
  %v1909 = vadd.f32 %v1717, %v1791
  %v1910 = vadd.f32 %v1718, %v1793
  %v1911 = vadd.f32 %v1719, %v1795
  %v1912 = vadd.f32 %v1720, %v1797
  %v1913 = vadd.f32 %v1721, %v1799
  %v1914 = vadd.f32 %v1722, %v1801
  %v1915 = vadd.f32 %v1723, %v1803
  %v1916 = vadd.f32 %v1724, %v1805
  %v1917 = vadd.f32 %v1725, %v1807
  %v1918 = vadd.f32 %v1726, %v1809
  %v1919 = vadd.f32 %v1727, %v1811
  %v1920 = vadd.f32 %v1728, %v1813
  %v1921 = vadd.f32 %v1729, %v1815
  %v1922 = vadd.f32 %v1730, %v1817
  %v1923 = vadd.f32 %v1731, %v1819
  %v1924 = vadd.f32 %v1732, %v1821
  %v1925 = vadd.f32 %v1733, %v1823
  %v1926 = vadd.f32 %v1734, %v1825
  %v1927 = vadd.f32 %v1735, %v1827
  %v1928 = vadd.f32 %v1736, %v1829
  %v1929 = vadd.f32 %v1737, %v1831
  %v1930 = vadd.f32 %v1738, %v1833
  %v1931 = vadd.f32 %v1739, %v1835
  %1980 = vrot.lane.b32.xlu0 %v1116, 124
  %v1981 = vpop.permute.xlu0 %1980
  %1982 = vrot.lane.b32.xlu0 %v1117, 124
  %v1983 = vpop.permute.xlu0 %1982
  %1984 = vrot.lane.b32.xlu0 %v1118, 124
  %v1985 = vpop.permute.xlu0 %1984
  %1986 = vrot.lane.b32.xlu0 %v1119, 124
  %v1987 = vpop.permute.xlu0 %1986
  %1988 = vrot.lane.b32.xlu0 %v1120, 124
  %v1989 = vpop.permute.xlu0 %1988
  %1990 = vrot.lane.b32.xlu0 %v1121, 124
  %v1991 = vpop.permute.xlu0 %1990
  %1992 = vrot.lane.b32.xlu0 %v1122, 124
  %v1993 = vpop.permute.xlu0 %1992
  %1994 = vrot.lane.b32.xlu0 %v1123, 124
  %v1995 = vpop.permute.xlu0 %1994
  %1996 = vrot.lane.b32.xlu0 %v1124, 124
  %v1997 = vpop.permute.xlu0 %1996
  %1998 = vrot.lane.b32.xlu0 %v1125, 124
  %v1999 = vpop.permute.xlu0 %1998
  %2000 = vrot.lane.b32.xlu0 %v1126, 124
  %v2001 = vpop.permute.xlu0 %2000
  %2002 = vrot.lane.b32.xlu0 %v1127, 124
  %v2003 = vpop.permute.xlu0 %2002
  %2004 = vrot.lane.b32.xlu0 %v1128, 124
  %v2005 = vpop.permute.xlu0 %2004
  %2006 = vrot.lane.b32.xlu0 %v1129, 124
  %v2007 = vpop.permute.xlu0 %2006
  %2008 = vrot.lane.b32.xlu0 %v1130, 124
  %v2009 = vpop.permute.xlu0 %2008
  %2010 = vrot.lane.b32.xlu0 %v1131, 124
  %v2011 = vpop.permute.xlu0 %2010
  %2012 = vrot.lane.b32.xlu0 %v1132, 124
  %v2013 = vpop.permute.xlu0 %2012
  %2014 = vrot.lane.b32.xlu0 %v1133, 124
  %v2015 = vpop.permute.xlu0 %2014
  %2016 = vrot.lane.b32.xlu0 %v1134, 124
  %v2017 = vpop.permute.xlu0 %2016
  %2018 = vrot.lane.b32.xlu0 %v1135, 124
  %v2019 = vpop.permute.xlu0 %2018
  %2020 = vrot.lane.b32.xlu0 %v1136, 124
  %v2021 = vpop.permute.xlu0 %2020
  %2022 = vrot.lane.b32.xlu0 %v1137, 124
  %v2023 = vpop.permute.xlu0 %2022
  %2024 = vrot.lane.b32.xlu0 %v1138, 124
  %v2025 = vpop.permute.xlu0 %2024
  %2026 = vrot.lane.b32.xlu0 %v1139, 124
  %v2027 = vpop.permute.xlu0 %2026
  %2028 = vrot.lane.b32.xlu0 %v1140, 124
  %v2029 = vpop.permute.xlu0 %2028
  %2030 = vrot.lane.b32.xlu0 %v1141, 124
  %v2031 = vpop.permute.xlu0 %2030
  %2032 = vrot.lane.b32.xlu0 %v1142, 124
  %v2033 = vpop.permute.xlu0 %2032
  %2034 = vrot.lane.b32.xlu0 %v1143, 124
  %v2035 = vpop.permute.xlu0 %2034
  %2036 = vrot.lane.b32.xlu0 %v1144, 124
  %v2037 = vpop.permute.xlu0 %2036
  %2038 = vrot.lane.b32.xlu0 %v1145, 124
  %v2039 = vpop.permute.xlu0 %2038
  %2040 = vrot.lane.b32.xlu0 %v1146, 124
  %v2041 = vpop.permute.xlu0 %2040
  %2042 = vrot.lane.b32.xlu0 %v1147, 124
  %v2043 = vpop.permute.xlu0 %2042
  %2044 = vrot.lane.b32.xlu0 %v1148, 124
  %v2045 = vpop.permute.xlu0 %2044
  %2046 = vrot.lane.b32.xlu0 %v1149, 124
  %v2047 = vpop.permute.xlu0 %2046
  %2048 = vrot.lane.b32.xlu0 %v1150, 124
  %v2049 = vpop.permute.xlu0 %2048
  %2050 = vrot.lane.b32.xlu0 %v1151, 124
  %v2051 = vpop.permute.xlu0 %2050
  %2052 = vrot.lane.b32.xlu0 %v1152, 124
  %v2053 = vpop.permute.xlu0 %2052
  %2054 = vrot.lane.b32.xlu0 %v1153, 124
  %v2055 = vpop.permute.xlu0 %2054
  %2056 = vrot.lane.b32.xlu0 %v1154, 124
  %v2057 = vpop.permute.xlu0 %2056
  %2058 = vrot.lane.b32.xlu0 %v1155, 124
  %v2059 = vpop.permute.xlu0 %2058
  %2060 = vrot.lane.b32.xlu0 %v1156, 124
  %v2061 = vpop.permute.xlu0 %2060
  %2062 = vrot.lane.b32.xlu0 %v1157, 124
  %v2063 = vpop.permute.xlu0 %2062
  %2064 = vrot.lane.b32.xlu0 %v1158, 124
  %v2065 = vpop.permute.xlu0 %2064
  %2066 = vrot.lane.b32.xlu0 %v1159, 124
  %v2067 = vpop.permute.xlu0 %2066
  %2068 = vrot.lane.b32.xlu0 %v1160, 124
  %v2069 = vpop.permute.xlu0 %2068
  %2070 = vrot.lane.b32.xlu0 %v1161, 124
  %v2071 = vpop.permute.xlu0 %2070
  %2072 = vrot.lane.b32.xlu0 %v1162, 124
  %v2073 = vpop.permute.xlu0 %2072
  %2074 = vrot.lane.b32.xlu0 %v1163, 124
  %v2075 = vpop.permute.xlu0 %2074
  %v2124 = vadd.f32 %v1884, %v1981
  %v2125 = vadd.f32 %v1885, %v1983
  %v2126 = vadd.f32 %v1886, %v1985
  %v2127 = vadd.f32 %v1887, %v1987
  %v2128 = vadd.f32 %v1888, %v1989
  %v2129 = vadd.f32 %v1889, %v1991
  %v2130 = vadd.f32 %v1890, %v1993
  %v2131 = vadd.f32 %v1891, %v1995
  %v2132 = vadd.f32 %v1892, %v1997
  %v2133 = vadd.f32 %v1893, %v1999
  %v2134 = vadd.f32 %v1894, %v2001
  %v2135 = vadd.f32 %v1895, %v2003
  %v2136 = vadd.f32 %v1896, %v2005
  %v2137 = vadd.f32 %v1897, %v2007
  %v2138 = vadd.f32 %v1898, %v2009
  %v2139 = vadd.f32 %v1899, %v2011
  %v2140 = vadd.f32 %v1900, %v2013
  %v2141 = vadd.f32 %v1901, %v2015
  %v2142 = vadd.f32 %v1902, %v2017
  %v2143 = vadd.f32 %v1903, %v2019
  %v2144 = vadd.f32 %v1904, %v2021
  %v2145 = vadd.f32 %v1905, %v2023
  %v2146 = vadd.f32 %v1906, %v2025
  %v2147 = vadd.f32 %v1907, %v2027
  %v2148 = vadd.f32 %v1908, %v2029
  %v2149 = vadd.f32 %v1909, %v2031
  %v2150 = vadd.f32 %v1910, %v2033
  %v2151 = vadd.f32 %v1911, %v2035
  %v2152 = vadd.f32 %v1912, %v2037
  %v2153 = vadd.f32 %v1913, %v2039
  %v2154 = vadd.f32 %v1914, %v2041
  %v2155 = vadd.f32 %v1915, %v2043
  %v2156 = vadd.f32 %v1916, %v2045
  %v2157 = vadd.f32 %v1917, %v2047
  %v2158 = vadd.f32 %v1918, %v2049
  %v2159 = vadd.f32 %v1919, %v2051
  %v2160 = vadd.f32 %v1920, %v2053
  %v2161 = vadd.f32 %v1921, %v2055
  %v2162 = vadd.f32 %v1922, %v2057
  %v2163 = vadd.f32 %v1923, %v2059
  %v2164 = vadd.f32 %v1924, %v2061
  %v2165 = vadd.f32 %v1925, %v2063
  %v2166 = vadd.f32 %v1926, %v2065
  %v2167 = vadd.f32 %v1927, %v2067
  %v2168 = vadd.f32 %v1928, %v2069
  %v2169 = vadd.f32 %v1929, %v2071
  %v2170 = vadd.f32 %v1930, %v2073
  %v2171 = vadd.f32 %v1931, %v2075
  %vm2172 = vcmask 130048
  %2173 = vst.msk [vmem:[%s1] sm:$0xff] %vm2172, %v2124
  %2174 = vst.msk [vmem:[%s1 + $0x8] sm:$0xff] %vm2172, %v2125
  %2175 = vst.msk [vmem:[%s1 + $0x10] sm:$0xff] %vm2172, %v2126
  %2176 = vst.msk [vmem:[%s1 + $0x18] sm:$0xff] %vm2172, %v2127
  %2177 = vst.msk [vmem:[%s1 + $0x20] sm:$0xff] %vm2172, %v2128
  %2178 = vst.msk [vmem:[%s1 + $0x28] sm:$0xff] %vm2172, %v2129
  %2179 = vst.msk [vmem:[%s1 + $0x30] sm:$0xff] %vm2172, %v2130
  %2180 = vst.msk [vmem:[%s1 + $0x38] sm:$0xff] %vm2172, %v2131
  %2181 = vst.msk [vmem:[%s1 + $0x40] sm:$0xff] %vm2172, %v2132
  %2182 = vst.msk [vmem:[%s1 + $0x48] sm:$0xff] %vm2172, %v2133
  %2183 = vst.msk [vmem:[%s1 + $0x50] sm:$0xff] %vm2172, %v2134
  %2184 = vst.msk [vmem:[%s1 + $0x58] sm:$0xff] %vm2172, %v2135
  %2185 = vst.msk [vmem:[%s1 + $0x60] sm:$0xff] %vm2172, %v2136
  %2186 = vst.msk [vmem:[%s1 + $0x68] sm:$0xff] %vm2172, %v2137
  %2187 = vst.msk [vmem:[%s1 + $0x70] sm:$0xff] %vm2172, %v2138
  %2188 = vst.msk [vmem:[%s1 + $0x78] sm:$0xff] %vm2172, %v2139
  %2189 = vst.msk [vmem:[%s1 + $0x80] sm:$0xff] %vm2172, %v2140
  %2190 = vst.msk [vmem:[%s1 + $0x88] sm:$0xff] %vm2172, %v2141
  %2191 = vst.msk [vmem:[%s1 + $0x90] sm:$0xff] %vm2172, %v2142
  %2192 = vst.msk [vmem:[%s1 + $0x98] sm:$0xff] %vm2172, %v2143
  %2193 = vst.msk [vmem:[%s1 + $0xa0] sm:$0xff] %vm2172, %v2144
  %2194 = vst.msk [vmem:[%s1 + $0xa8] sm:$0xff] %vm2172, %v2145
  %2195 = vst.msk [vmem:[%s1 + $0xb0] sm:$0xff] %vm2172, %v2146
  %2196 = vst.msk [vmem:[%s1 + $0xb8] sm:$0xff] %vm2172, %v2147
  %2197 = vst.msk [vmem:[%s1 + $0xc0] sm:$0xff] %vm2172, %v2148
  %2198 = vst.msk [vmem:[%s1 + $0xc8] sm:$0xff] %vm2172, %v2149
  %2199 = vst.msk [vmem:[%s1 + $0xd0] sm:$0xff] %vm2172, %v2150
  %2200 = vst.msk [vmem:[%s1 + $0xd8] sm:$0xff] %vm2172, %v2151
  %2201 = vst.msk [vmem:[%s1 + $0xe0] sm:$0xff] %vm2172, %v2152
  %2202 = vst.msk [vmem:[%s1 + $0xe8] sm:$0xff] %vm2172, %v2153
  %2203 = vst.msk [vmem:[%s1 + $0xf0] sm:$0xff] %vm2172, %v2154
  %2204 = vst.msk [vmem:[%s1 + $0xf8] sm:$0xff] %vm2172, %v2155
  %2205 = vst.msk [vmem:[%s1 + $0x100] sm:$0xff] %vm2172, %v2156
  %2206 = vst.msk [vmem:[%s1 + $0x108] sm:$0xff] %vm2172, %v2157
  %2207 = vst.msk [vmem:[%s1 + $0x110] sm:$0xff] %vm2172, %v2158
  %2208 = vst.msk [vmem:[%s1 + $0x118] sm:$0xff] %vm2172, %v2159
  %2209 = vst.msk [vmem:[%s1 + $0x120] sm:$0xff] %vm2172, %v2160
  %2210 = vst.msk [vmem:[%s1 + $0x128] sm:$0xff] %vm2172, %v2161
  %2211 = vst.msk [vmem:[%s1 + $0x130] sm:$0xff] %vm2172, %v2162
  %2212 = vst.msk [vmem:[%s1 + $0x138] sm:$0xff] %vm2172, %v2163
  %2213 = vst.msk [vmem:[%s1 + $0x140] sm:$0xff] %vm2172, %v2164
  %2214 = vst.msk [vmem:[%s1 + $0x148] sm:$0xff] %vm2172, %v2165
  %2215 = vst.msk [vmem:[%s1 + $0x150] sm:$0xff] %vm2172, %v2166
  %2216 = vst.msk [vmem:[%s1 + $0x158] sm:$0xff] %vm2172, %v2167
  %2217 = vst.msk [vmem:[%s1 + $0x160] sm:$0xff] %vm2172, %v2168
  %2218 = vst.msk [vmem:[%s1 + $0x168] sm:$0xff] %vm2172, %v2169
  %2219 = vst.msk [vmem:[%s1 + $0x170] sm:$0xff] %vm2172, %v2170
  %2220 = vst.msk [vmem:[%s1 + $0x178] sm:$0xff] %vm2172, %v2171
  // Predicated region
  $region6: #{tpu_custom_call.1} parent=0 // pred_check
    _
  $region7: #{tpu_custom_call.1} parent=0 // pred_check_branch
    %2222 = sbr.rel (0) target = $region9
  $region8: #{tpu_custom_call.1} parent=0 // pred_region
    _
  $region9: #{tpu_custom_call.1} parent=0 // pred_fallthru
    _
  // Predicated region
  $region10: #{tpu_custom_call.1} parent=0 // pred_check
    _
  $region11: #{tpu_custom_call.1} parent=0 // pred_check_branch
    %2224 = sbr.rel (0) target = $region13
  $region12: #{tpu_custom_call.1} parent=0 // pred_region
    _
  $region13: #{tpu_custom_call.1} parent=0 // pred_fallthru
    _

</llo_original>
